<compile_context>
chip_gen: v7x
topology: tpu7x:2x2x1
jax: 0.10.0
libtpu: 0.0.40
codegen_flags: <defaults>
</compile_context>

<pallas_src>
import functools

import jax
import jax.numpy as jnp
from jax.experimental import pallas as pl
from jax.experimental.pallas import tpu as pltpu

EPS = 1e-5


def round_width(width, multiplier=0.0625, min_width=8, divisor=8):
    if not multiplier:
        return width
    width *= multiplier
    min_width = min_width or divisor
    width_out = max(min_width, int(width + divisor / 2) // divisor * divisor)
    if width_out < 0.9 * width:
        width_out += divisor
    return int(width_out)


def _bn_scale_shift(gamma, beta, mean, var):
    scale = gamma / jnp.sqrt(var + EPS)
    shift = beta - mean * scale
    return scale, shift


def _make_taps(T, H, W):
    """Per 3x3x3 tap: flat lane offset + indices of the boundary rows it needs.

    Boundary rows (built host-side, shape (6, THW)):
      0: t>=1   1: t<=T-2   2: h>=1   3: h<=H-2   4: w>=1   5: w<=W-2
    """
    taps = []
    for kt in range(3):
        for kh in range(3):
            for kw in range(3):
                dt, dh, dw = kt - 1, kh - 1, kw - 1
                off = dt * H * W + dh * W + dw
                rows = []
                if dt == -1:
                    rows.append(0)
                if dt == +1:
                    rows.append(1)
                if dh == -1:
                    rows.append(2)
                if dh == +1:
                    rows.append(3)
                if dw == -1:
                    rows.append(4)
                if dw == +1:
                    rows.append(5)
                taps.append((off, tuple(rows)))
    return tuple(taps)


# ---------------------------------------------------------------------------
# Fully fused Bottleneck kernel (one grid step per batch element).
# Layout: channel-major.  x / out blocks are (1, C, THW) -> lane-dense.
# Depthwise taps: pltpu.roll lane rotations over the flattened THW axis with
# boundary masks built from 6 per-dimension validity rows ("roll wrap implies
# out-of-bounds" => wrapped lanes are always masked to zero).
# ---------------------------------------------------------------------------
def _bottleneck_kernel(x_ref, bvalid_ref, w1_ref, b1_ref, w2_ref, b2_ref,
                       sew1_ref, seb1_ref, sew2t_ref, seb2_ref,
                       w3_ref, b3_ref, o_ref, *, taps, inv_thw):
    x = x_ref[0]                                             # (Cin, THW) f32

    # conv1 (1x1x1, bn1 folded into w1) + shift + ReLU -- MXU matmul whose
    # output lane dim is the wide THW axis.
    y1 = jnp.dot(w1_ref[...], x, preferred_element_type=jnp.float32)
    y1 = jnp.maximum(y1 + b1_ref[...], 0.0)                  # (Cm, THW)

    bvalid = bvalid_ref[...]                                 # (6, THW) 0/1 f32
    w2 = w2_ref[...]                                         # (Cm, 27) bn2-folded
    n_flat = y1.shape[-1]

    # Depthwise 3x3x3 + bn2.  Accumulator initialised with the centre tap
    # (index 13: no roll, no mask); the 26 neighbour taps are XLU lane rolls
    # masked by the product of at most 3 single-row (1, THW) validity rows.
    acc = y1 * w2[:, 13:14]
    for tap, (off, rows) in enumerate(taps):
        if not rows and off == 0:
            continue                                         # centre tap done
        shift = (-off) % n_flat
        shifted = y1 if shift == 0 else pltpu.roll(y1, shift=shift, axis=1)
        mask = None
        for r in rows:                                       # <=2 muls on 1 row
            row = bvalid[r:r + 1, :]
            mask = row if mask is None else mask * row
        contrib = shifted if mask is None else shifted * mask
        acc = acc + contrib * w2[:, tap:tap + 1]
    acc = acc + b2_ref[...]                                  # bn2 shift

    # --- SE branch, entirely in VMEM: global avg pool + 2-layer MLP ---------
    # Written as broadcast-multiply-reduce so no transposes / 1-lane matmuls.
    pooled = jnp.sum(acc, axis=1, keepdims=True) * inv_thw            # (Cm, 1)
    h = jnp.sum(sew1_ref[...] * pooled, axis=0, keepdims=True)        # (1, Cr)
    h = jnp.maximum(h + seb1_ref[...], 0.0)
    g = jnp.sum(sew2t_ref[...] * h, axis=1, keepdims=True)            # (Cm, 1)
    gate = jax.nn.sigmoid(g + seb2_ref[...])

    # --- gate * SiLU -> conv3 (1x1x1, bn3 folded) -> +residual -> ReLU ------
    v = acc * gate
    v = v * jax.nn.sigmoid(v)                                # SiLU / swish
    y = jnp.dot(w3_ref[...], v, preferred_element_type=jnp.float32)   # (Cout, THW)
    y = y + b3_ref[...] + x                                  # residual (Cin==Cout)
    o_ref[0] = jnp.maximum(y, 0.0).astype(o_ref.dtype)


# ---------------------------------------------------------------------------
# Bottleneck forward (index=0 -> SE branch active; stride=1, downsample=None)
# ---------------------------------------------------------------------------
def bottleneck_forward(x_ncdhw, params):
    N, Cin, T, H, W = x_ncdhw.shape
    Cm = params["w1"].shape[1]
    Cout = params["w3"].shape[1]
    Cr = params["se_w1"].shape[1]
    assert Cin == Cout, "no downsample => residual requires Cin == Cout"
    THW = T * H * W
    x_flat = x_ncdhw.reshape(N, Cin, THW)                    # NCDHW flatten (free)

    # --- fold BN (eval mode) scales into conv weights; keep only shifts -----
    s1, b1 = _bn_scale_shift(params["bn1_gamma"], params["bn1_beta"],
                             params["bn1_mean"], params["bn1_var"])
    w1t = (params["w1"] * s1[None, :]).T                     # (Cm, Cin)
    b1c = b1.reshape(Cm, 1)

    s2, b2 = _bn_scale_shift(params["bn2_gamma"], params["bn2_beta"],
                             params["bn2_mean"], params["bn2_var"])
    w2f = (params["w2"].reshape(27, Cm) * s2[None, :]).T     # (Cm, 27)
    b2c = b2.reshape(Cm, 1)

    s3, b3 = _bn_scale_shift(params["bn3_gamma"], params["bn3_beta"],
                             params["bn3_mean"], params["bn3_var"])
    w3t = (params["w3"] * s3[None, :]).T                     # (Cout, Cm)
    b3c = b3.reshape(Cout, 1)

    se_w1 = params["se_w1"]                                  # (Cm, Cr) natural
    se_b1r = params["se_b1"].reshape(1, Cr)
    se_w2t = params["se_w2"].T                               # (Cm, Cr)
    se_b2c = params["se_b2"].reshape(Cm, 1)

    # --- 6 boundary-validity rows (handles degenerate T/H/W too) ------------
    idx = jnp.arange(THW)
    t_idx = idx // (H * W)
    h_idx = (idx // W) % H
    w_idx = idx % W
    bvalid = jnp.stack([t_idx >= 1, t_idx <= T - 2,
                        h_idx >= 1, h_idx <= H - 2,
                        w_idx >= 1, w_idx <= W - 2]).astype(jnp.float32)  # (6, THW)

    taps = _make_taps(T, H, W)

    # --- VMEM budget: 2x double-buffered HBM blocks + f32 working tiles -----
    fb = 4
    block_bytes = (Cin * THW + Cout * THW) * fb              # x + out blocks
    work_bytes = 6 * Cm * THW * fb                           # y1/acc/v/y headroom
    const_bytes = (6 * THW + Cm * (Cin + 27 + 2 * Cr + 2) + Cout * (Cm + 1)
                   + Cr) * fb
    vmem_needed = 2 * block_bytes + work_bytes + const_bytes
    vmem_limit = int(min(max(2 * vmem_needed, 16 * 2**20), 64 * 2**20))

    kernel = functools.partial(_bottleneck_kernel, taps=taps,
                               inv_thw=float(1.0 / THW))

    out = pl.pallas_call(
        kernel,
        out_shape=jax.ShapeDtypeStruct((N, Cout, THW), x_ncdhw.dtype),
        grid=(N,),
        in_specs=[
            pl.BlockSpec((1, Cin, THW), lambda n: (n, 0, 0)),   # x (also residual)
            pl.BlockSpec((6, THW), lambda n: (0, 0)),           # boundary rows
            pl.BlockSpec((Cm, Cin), lambda n: (0, 0)),          # conv1 (bn1 folded)
            pl.BlockSpec((Cm, 1), lambda n: (0, 0)),            # bn1 shift
            pl.BlockSpec((Cm, 27), lambda n: (0, 0)),           # dw conv2 (bn2 folded)
            pl.BlockSpec((Cm, 1), lambda n: (0, 0)),            # bn2 shift
            pl.BlockSpec((Cm, Cr), lambda n: (0, 0)),           # SE fc_1 weight
            pl.BlockSpec((1, Cr), lambda n: (0, 0)),            # SE fc_1 bias
            pl.BlockSpec((Cm, Cr), lambda n: (0, 0)),           # SE fc_2 weight^T
            pl.BlockSpec((Cm, 1), lambda n: (0, 0)),            # SE fc_2 bias
            pl.BlockSpec((Cout, Cm), lambda n: (0, 0)),         # conv3 (bn3 folded)
            pl.BlockSpec((Cout, 1), lambda n: (0, 0)),          # bn3 shift
        ],
        out_specs=pl.BlockSpec((1, Cout, THW), lambda n: (n, 0, 0)),
        compiler_params=pltpu.CompilerParams(
            dimension_semantics=("parallel",),                  # N=2 feeds 2 TCs
            vmem_limit_bytes=vmem_limit),
    )(x_flat, bvalid, w1t, b1c, w2f, b2c,
      se_w1, se_b1r, se_w2t, se_b2c, w3t, b3c)

    return out.reshape(N, Cout, T, H, W)                     # already NCDHW


# ---------------------------------------------------------------------------
# Deterministic parameter init (shapes implied by the module __init__)
# ---------------------------------------------------------------------------
def init_params(key, in_planes, planes):
    Cm, Cout = planes
    Cr = round_width(Cm)
    ks = jax.random.split(key, 19)

    def u(k, shape, lo=-0.2, hi=0.2):
        return jax.random.uniform(k, shape, jnp.float32, lo, hi)

    return dict(
        w1=u(ks[0], (in_planes, Cm)),                 # conv1 (1x1x1) weights
        bn1_gamma=u(ks[1], (Cm,), 0.5, 1.5), bn1_beta=u(ks[2], (Cm,)),
        bn1_mean=u(ks[3], (Cm,)), bn1_var=u(ks[4], (Cm,), 0.5, 1.5),
        w2=u(ks[5], (3, 3, 3, Cm)),                   # depthwise conv2 weights
        bn2_gamma=u(ks[6], (Cm,), 0.5, 1.5), bn2_beta=u(ks[7], (Cm,)),
        bn2_mean=u(ks[8], (Cm,)), bn2_var=u(ks[9], (Cm,), 0.5, 1.5),
        se_w1=u(ks[10], (Cm, Cr)), se_b1=u(ks[11], (Cr,)),
        se_w2=u(ks[12], (Cr, Cm)), se_b2=u(ks[13], (Cm,)),
        w3=u(ks[14], (Cm, Cout)),                     # conv3 (1x1x1) weights
        bn3_gamma=u(ks[15], (Cout,), 0.5, 1.5), bn3_beta=u(ks[16], (Cout,)),
        bn3_mean=u(ks[17], (Cout,)), bn3_var=u(ks[18], (Cout,), 0.5, 1.5),
    )


# ---------------------------------------------------------------------------
# Pure-JAX reference (same math) for the correctness check
# ---------------------------------------------------------------------------
def reference_forward(x_ncdhw, params):
    x = jnp.transpose(x_ncdhw, (0, 2, 3, 4, 1))

    def bn(v, g, b, m, var):
        return (v - m) / jnp.sqrt(var + EPS) * g + b

    out = jnp.einsum("nthwc,cd->nthwd", x, params["w1"])
    out = bn(out, params["bn1_gamma"], params["bn1_beta"],
             params["bn1_mean"], params["bn1_var"])
    out = jnp.maximum(out, 0.0)

    N, T, H, W, C = out.shape
    xp = jnp.pad(out, ((0, 0), (1, 1), (1, 1), (1, 1), (0, 0)))
    acc = jnp.zeros_like(out)
    for dt in range(3):
        for dh in range(3):
            for dw in range(3):
                acc = acc + xp[:, dt:dt + T, dh:dh + H, dw:dw + W, :] \
                      * params["w2"][dt, dh, dw]
    out = bn(acc, params["bn2_gamma"], params["bn2_beta"],
             params["bn2_mean"], params["bn2_var"])

    pooled = out.mean(axis=(1, 2, 3))
    h = jnp.maximum(pooled @ params["se_w1"] + params["se_b1"], 0.0)
    gate = jax.nn.sigmoid(h @ params["se_w2"] + params["se_b2"])
    out = out * gate[:, None, None, None, :]
    out = out * jax.nn.sigmoid(out)

    out = jnp.einsum("nthwc,cd->nthwd", out, params["w3"])
    out = bn(out, params["bn3_gamma"], params["bn3_beta"],
             params["bn3_mean"], params["bn3_var"])
    out = jnp.maximum(out + x, 0.0)
    return jnp.transpose(out, (0, 4, 1, 2, 3))


if __name__ == "__main__":
    key = jax.random.PRNGKey(0)
    kx, kp = jax.random.split(key)

    # PyTorch layout: (N, C, T, H, W); in_planes == planes[1] (no downsample).
    # TODO(synk): BatchNorm is eval-mode only (running stats folded); the
    # training-mode batch-statistics update has no place in a fused fwd kernel.
    N, Cin, T, H, W = 2, 16, 4, 8, 8
    planes = (16, 16)

    x = jax.random.normal(kx, (N, Cin, T, H, W), jnp.float32)
    params = init_params(kp, Cin, planes)

    fwd = jax.jit(bottleneck_forward)
    out = jax.block_until_ready(fwd(x, params))
    assert out.shape == (N, planes[1], T, H, W), out.shape

    ref = reference_forward(x, params)
    err = float(jnp.max(jnp.abs(out - ref)))
    assert jnp.allclose(out, ref, rtol=2e-4, atol=2e-4), f"max abs err {err}"

    print("KERNEL_OK")
</pallas_src>

<mosaic_0001>
module attributes {stable_mosaic.version = 11 : i64} {
  func.func @_bottleneck_kernel(%arg0: i32, %arg1: memref<1x16x256xf32, #tpu.memory_space<vmem>>, %arg2: memref<6x256xf32, #tpu.memory_space<vmem>>, %arg3: memref<16x16xf32, #tpu.memory_space<vmem>>, %arg4: memref<16x1xf32, #tpu.memory_space<vmem>>, %arg5: memref<16x27xf32, #tpu.memory_space<vmem>>, %arg6: memref<16x1xf32, #tpu.memory_space<vmem>>, %arg7: memref<16x8xf32, #tpu.memory_space<vmem>>, %arg8: memref<1x8xf32, #tpu.memory_space<vmem>>, %arg9: memref<16x8xf32, #tpu.memory_space<vmem>>, %arg10: memref<16x1xf32, #tpu.memory_space<vmem>>, %arg11: memref<16x16xf32, #tpu.memory_space<vmem>>, %arg12: memref<16x1xf32, #tpu.memory_space<vmem>>, %arg13: memref<1x16x256xf32, #tpu.memory_space<vmem>>) attributes {dimension_semantics = [#tpu.dimension_semantics<parallel>], iteration_bounds = array<i64: 2>, scalar_prefetch = 0 : i64, scratch_operands = 0 : i64, tpu.core_type = #tpu.core_type<tc>, window_params = [{transform_indices = @transform_0, window_bounds = array<i64: 1, 16, 256>}, {pipeline_mode = #tpu.pipeline_mode<synchronous>, transform_indices = @transform_1, window_bounds = array<i64: 6, 256>}, {pipeline_mode = #tpu.pipeline_mode<synchronous>, transform_indices = @transform_2, window_bounds = array<i64: 16, 16>}, {pipeline_mode = #tpu.pipeline_mode<synchronous>, transform_indices = @transform_3, window_bounds = array<i64: 16, 1>}, {pipeline_mode = #tpu.pipeline_mode<synchronous>, transform_indices = @transform_4, window_bounds = array<i64: 16, 27>}, {pipeline_mode = #tpu.pipeline_mode<synchronous>, transform_indices = @transform_5, window_bounds = array<i64: 16, 1>}, {pipeline_mode = #tpu.pipeline_mode<synchronous>, transform_indices = @transform_6, window_bounds = array<i64: 16, 8>}, {pipeline_mode = #tpu.pipeline_mode<synchronous>, transform_indices = @transform_7, window_bounds = array<i64: 1, 8>}, {pipeline_mode = #tpu.pipeline_mode<synchronous>, transform_indices = @transform_8, window_bounds = array<i64: 16, 8>}, {pipeline_mode = #tpu.pipeline_mode<synchronous>, transform_indices = @transform_9, window_bounds = array<i64: 16, 1>}, {pipeline_mode = #tpu.pipeline_mode<synchronous>, transform_indices = @transform_10, window_bounds = array<i64: 16, 16>}, {pipeline_mode = #tpu.pipeline_mode<synchronous>, transform_indices = @transform_11, window_bounds = array<i64: 16, 1>}, {transform_indices = @transform_12, window_bounds = array<i64: 1, 16, 256>}]} {
    %c0 = arith.constant 0 : index
    %c0_0 = arith.constant 0 : index
    %c0_1 = arith.constant 0 : index
    %0 = vector.load %arg1[%c0, %c0_0, %c0_1] : memref<1x16x256xf32, #tpu.memory_space<vmem>>, vector<1x16x256xf32>
    %1 = vector.shape_cast %0 : vector<1x16x256xf32> to vector<16x256xf32>
    %c0_2 = arith.constant 0 : index
    %c0_3 = arith.constant 0 : index
    %2 = vector.load %arg3[%c0_2, %c0_3] : memref<16x16xf32, #tpu.memory_space<vmem>>, vector<16x16xf32>
    %cst = arith.constant dense<0.000000e+00> : vector<16x256xf32>
    %3 = tpu.matmul %2, %1, %cst {dimension_numbers = #tpu.dot_dimension_numbers<[1], [0], [0], [1], [0, 0, 1, 1], [], []>} : vector<16x16xf32>, vector<16x256xf32>, vector<16x256xf32> -> vector<16x256xf32>
    %c0_4 = arith.constant 0 : index
    %c0_5 = arith.constant 0 : index
    %4 = vector.load %arg4[%c0_4, %c0_5] : memref<16x1xf32, #tpu.memory_space<vmem>>, vector<16x1xf32>
    %5 = vector.broadcast %4 : vector<16x1xf32> to vector<16x256xf32>
    %6 = arith.addf %3, %5 : vector<16x256xf32>
    %cst_6 = arith.constant 0.000000e+00 : f32
    %7 = vector.broadcast %cst_6 : f32 to vector<16x256xf32>
    %8 = arith.maximumf %6, %7 : vector<16x256xf32>
    %c0_7 = arith.constant 0 : index
    %c0_8 = arith.constant 0 : index
    %9 = vector.load %arg2[%c0_7, %c0_8] : memref<6x256xf32, #tpu.memory_space<vmem>>, vector<6x256xf32>
    %c0_9 = arith.constant 0 : index
    %c0_10 = arith.constant 0 : index
    %10 = vector.load %arg5[%c0_9, %c0_10] : memref<16x27xf32, #tpu.memory_space<vmem>>, vector<16x27xf32>
    %11 = vector.extract_strided_slice %10 {offsets = [0, 13], sizes = [16, 1], strides = [1, 1]} : vector<16x27xf32> to vector<16x1xf32>
    %12 = vector.broadcast %11 : vector<16x1xf32> to vector<16x256xf32>
    %13 = arith.mulf %8, %12 : vector<16x256xf32>
    %c73_i32 = arith.constant 73 : i32
    %14 = tpu.dynamic_rotate %8 by %c73_i32 dim 1 : vector<16x256xf32>, i32 -> vector<16x256xf32>
    %15 = vector.extract_strided_slice %9 {offsets = [0, 0], sizes = [1, 256], strides = [1, 1]} : vector<6x256xf32> to vector<1x256xf32>
    %16 = vector.extract_strided_slice %9 {offsets = [2, 0], sizes = [1, 256], strides = [1, 1]} : vector<6x256xf32> to vector<1x256xf32>
    %17 = arith.mulf %15, %16 : vector<1x256xf32>
    %18 = vector.extract_strided_slice %9 {offsets = [4, 0], sizes = [1, 256], strides = [1, 1]} : vector<6x256xf32> to vector<1x256xf32>
    %19 = arith.mulf %17, %18 : vector<1x256xf32>
    %20 = vector.broadcast %19 : vector<1x256xf32> to vector<16x256xf32>
    %21 = arith.mulf %14, %20 : vector<16x256xf32>
    %22 = vector.extract_strided_slice %10 {offsets = [0, 0], sizes = [16, 1], strides = [1, 1]} : vector<16x27xf32> to vector<16x1xf32>
    %23 = vector.broadcast %22 : vector<16x1xf32> to vector<16x256xf32>
    %24 = arith.mulf %21, %23 : vector<16x256xf32>
    %25 = arith.addf %13, %24 : vector<16x256xf32>
    %c72_i32 = arith.constant 72 : i32
    %26 = tpu.dynamic_rotate %8 by %c72_i32 dim 1 : vector<16x256xf32>, i32 -> vector<16x256xf32>
    %27 = vector.extract_strided_slice %9 {offsets = [0, 0], sizes = [1, 256], strides = [1, 1]} : vector<6x256xf32> to vector<1x256xf32>
    %28 = vector.extract_strided_slice %9 {offsets = [2, 0], sizes = [1, 256], strides = [1, 1]} : vector<6x256xf32> to vector<1x256xf32>
    %29 = arith.mulf %27, %28 : vector<1x256xf32>
    %30 = vector.broadcast %29 : vector<1x256xf32> to vector<16x256xf32>
    %31 = arith.mulf %26, %30 : vector<16x256xf32>
    %32 = vector.extract_strided_slice %10 {offsets = [0, 1], sizes = [16, 1], strides = [1, 1]} : vector<16x27xf32> to vector<16x1xf32>
    %33 = vector.broadcast %32 : vector<16x1xf32> to vector<16x256xf32>
    %34 = arith.mulf %31, %33 : vector<16x256xf32>
    %35 = arith.addf %25, %34 : vector<16x256xf32>
    %c71_i32 = arith.constant 71 : i32
    %36 = tpu.dynamic_rotate %8 by %c71_i32 dim 1 : vector<16x256xf32>, i32 -> vector<16x256xf32>
    %37 = vector.extract_strided_slice %9 {offsets = [0, 0], sizes = [1, 256], strides = [1, 1]} : vector<6x256xf32> to vector<1x256xf32>
    %38 = vector.extract_strided_slice %9 {offsets = [2, 0], sizes = [1, 256], strides = [1, 1]} : vector<6x256xf32> to vector<1x256xf32>
    %39 = arith.mulf %37, %38 : vector<1x256xf32>
    %40 = vector.extract_strided_slice %9 {offsets = [5, 0], sizes = [1, 256], strides = [1, 1]} : vector<6x256xf32> to vector<1x256xf32>
    %41 = arith.mulf %39, %40 : vector<1x256xf32>
    %42 = vector.broadcast %41 : vector<1x256xf32> to vector<16x256xf32>
    %43 = arith.mulf %36, %42 : vector<16x256xf32>
    %44 = vector.extract_strided_slice %10 {offsets = [0, 2], sizes = [16, 1], strides = [1, 1]} : vector<16x27xf32> to vector<16x1xf32>
    %45 = vector.broadcast %44 : vector<16x1xf32> to vector<16x256xf32>
    %46 = arith.mulf %43, %45 : vector<16x256xf32>
    %47 = arith.addf %35, %46 : vector<16x256xf32>
    %c65_i32 = arith.constant 65 : i32
    %48 = tpu.dynamic_rotate %8 by %c65_i32 dim 1 : vector<16x256xf32>, i32 -> vector<16x256xf32>
    %49 = vector.extract_strided_slice %9 {offsets = [0, 0], sizes = [1, 256], strides = [1, 1]} : vector<6x256xf32> to vector<1x256xf32>
    %50 = vector.extract_strided_slice %9 {offsets = [4, 0], sizes = [1, 256], strides = [1, 1]} : vector<6x256xf32> to vector<1x256xf32>
    %51 = arith.mulf %49, %50 : vector<1x256xf32>
    %52 = vector.broadcast %51 : vector<1x256xf32> to vector<16x256xf32>
    %53 = arith.mulf %48, %52 : vector<16x256xf32>
    %54 = vector.extract_strided_slice %10 {offsets = [0, 3], sizes = [16, 1], strides = [1, 1]} : vector<16x27xf32> to vector<16x1xf32>
    %55 = vector.broadcast %54 : vector<16x1xf32> to vector<16x256xf32>
    %56 = arith.mulf %53, %55 : vector<16x256xf32>
    %57 = arith.addf %47, %56 : vector<16x256xf32>
    %c64_i32 = arith.constant 64 : i32
    %58 = tpu.dynamic_rotate %8 by %c64_i32 dim 1 : vector<16x256xf32>, i32 -> vector<16x256xf32>
    %59 = vector.extract_strided_slice %9 {offsets = [0, 0], sizes = [1, 256], strides = [1, 1]} : vector<6x256xf32> to vector<1x256xf32>
    %60 = vector.broadcast %59 : vector<1x256xf32> to vector<16x256xf32>
    %61 = arith.mulf %58, %60 : vector<16x256xf32>
    %62 = vector.extract_strided_slice %10 {offsets = [0, 4], sizes = [16, 1], strides = [1, 1]} : vector<16x27xf32> to vector<16x1xf32>
    %63 = vector.broadcast %62 : vector<16x1xf32> to vector<16x256xf32>
    %64 = arith.mulf %61, %63 : vector<16x256xf32>
    %65 = arith.addf %57, %64 : vector<16x256xf32>
    %c63_i32 = arith.constant 63 : i32
    %66 = tpu.dynamic_rotate %8 by %c63_i32 dim 1 : vector<16x256xf32>, i32 -> vector<16x256xf32>
    %67 = vector.extract_strided_slice %9 {offsets = [0, 0], sizes = [1, 256], strides = [1, 1]} : vector<6x256xf32> to vector<1x256xf32>
    %68 = vector.extract_strided_slice %9 {offsets = [5, 0], sizes = [1, 256], strides = [1, 1]} : vector<6x256xf32> to vector<1x256xf32>
    %69 = arith.mulf %67, %68 : vector<1x256xf32>
    %70 = vector.broadcast %69 : vector<1x256xf32> to vector<16x256xf32>
    %71 = arith.mulf %66, %70 : vector<16x256xf32>
    %72 = vector.extract_strided_slice %10 {offsets = [0, 5], sizes = [16, 1], strides = [1, 1]} : vector<16x27xf32> to vector<16x1xf32>
    %73 = vector.broadcast %72 : vector<16x1xf32> to vector<16x256xf32>
    %74 = arith.mulf %71, %73 : vector<16x256xf32>
    %75 = arith.addf %65, %74 : vector<16x256xf32>
    %c57_i32 = arith.constant 57 : i32
    %76 = tpu.dynamic_rotate %8 by %c57_i32 dim 1 : vector<16x256xf32>, i32 -> vector<16x256xf32>
    %77 = vector.extract_strided_slice %9 {offsets = [0, 0], sizes = [1, 256], strides = [1, 1]} : vector<6x256xf32> to vector<1x256xf32>
    %78 = vector.extract_strided_slice %9 {offsets = [3, 0], sizes = [1, 256], strides = [1, 1]} : vector<6x256xf32> to vector<1x256xf32>
    %79 = arith.mulf %77, %78 : vector<1x256xf32>
    %80 = vector.extract_strided_slice %9 {offsets = [4, 0], sizes = [1, 256], strides = [1, 1]} : vector<6x256xf32> to vector<1x256xf32>
    %81 = arith.mulf %79, %80 : vector<1x256xf32>
    %82 = vector.broadcast %81 : vector<1x256xf32> to vector<16x256xf32>
    %83 = arith.mulf %76, %82 : vector<16x256xf32>
    %84 = vector.extract_strided_slice %10 {offsets = [0, 6], sizes = [16, 1], strides = [1, 1]} : vector<16x27xf32> to vector<16x1xf32>
    %85 = vector.broadcast %84 : vector<16x1xf32> to vector<16x256xf32>
    %86 = arith.mulf %83, %85 : vector<16x256xf32>
    %87 = arith.addf %75, %86 : vector<16x256xf32>
    %c56_i32 = arith.constant 56 : i32
    %88 = tpu.dynamic_rotate %8 by %c56_i32 dim 1 : vector<16x256xf32>, i32 -> vector<16x256xf32>
    %89 = vector.extract_strided_slice %9 {offsets = [0, 0], sizes = [1, 256], strides = [1, 1]} : vector<6x256xf32> to vector<1x256xf32>
    %90 = vector.extract_strided_slice %9 {offsets = [3, 0], sizes = [1, 256], strides = [1, 1]} : vector<6x256xf32> to vector<1x256xf32>
    %91 = arith.mulf %89, %90 : vector<1x256xf32>
    %92 = vector.broadcast %91 : vector<1x256xf32> to vector<16x256xf32>
    %93 = arith.mulf %88, %92 : vector<16x256xf32>
    %94 = vector.extract_strided_slice %10 {offsets = [0, 7], sizes = [16, 1], strides = [1, 1]} : vector<16x27xf32> to vector<16x1xf32>
    %95 = vector.broadcast %94 : vector<16x1xf32> to vector<16x256xf32>
    %96 = arith.mulf %93, %95 : vector<16x256xf32>
    %97 = arith.addf %87, %96 : vector<16x256xf32>
    %c55_i32 = arith.constant 55 : i32
    %98 = tpu.dynamic_rotate %8 by %c55_i32 dim 1 : vector<16x256xf32>, i32 -> vector<16x256xf32>
    %99 = vector.extract_strided_slice %9 {offsets = [0, 0], sizes = [1, 256], strides = [1, 1]} : vector<6x256xf32> to vector<1x256xf32>
    %100 = vector.extract_strided_slice %9 {offsets = [3, 0], sizes = [1, 256], strides = [1, 1]} : vector<6x256xf32> to vector<1x256xf32>
    %101 = arith.mulf %99, %100 : vector<1x256xf32>
    %102 = vector.extract_strided_slice %9 {offsets = [5, 0], sizes = [1, 256], strides = [1, 1]} : vector<6x256xf32> to vector<1x256xf32>
    %103 = arith.mulf %101, %102 : vector<1x256xf32>
    %104 = vector.broadcast %103 : vector<1x256xf32> to vector<16x256xf32>
    %105 = arith.mulf %98, %104 : vector<16x256xf32>
    %106 = vector.extract_strided_slice %10 {offsets = [0, 8], sizes = [16, 1], strides = [1, 1]} : vector<16x27xf32> to vector<16x1xf32>
    %107 = vector.broadcast %106 : vector<16x1xf32> to vector<16x256xf32>
    %108 = arith.mulf %105, %107 : vector<16x256xf32>
    %109 = arith.addf %97, %108 : vector<16x256xf32>
    %c9_i32 = arith.constant 9 : i32
    %110 = tpu.dynamic_rotate %8 by %c9_i32 dim 1 : vector<16x256xf32>, i32 -> vector<16x256xf32>
    %111 = vector.extract_strided_slice %9 {offsets = [2, 0], sizes = [1, 256], strides = [1, 1]} : vector<6x256xf32> to vector<1x256xf32>
    %112 = vector.extract_strided_slice %9 {offsets = [4, 0], sizes = [1, 256], strides = [1, 1]} : vector<6x256xf32> to vector<1x256xf32>
    %113 = arith.mulf %111, %112 : vector<1x256xf32>
    %114 = vector.broadcast %113 : vector<1x256xf32> to vector<16x256xf32>
    %115 = arith.mulf %110, %114 : vector<16x256xf32>
    %116 = vector.extract_strided_slice %10 {offsets = [0, 9], sizes = [16, 1], strides = [1, 1]} : vector<16x27xf32> to vector<16x1xf32>
    %117 = vector.broadcast %116 : vector<16x1xf32> to vector<16x256xf32>
    %118 = arith.mulf %115, %117 : vector<16x256xf32>
    %119 = arith.addf %109, %118 : vector<16x256xf32>
    %c8_i32 = arith.constant 8 : i32
    %120 = tpu.dynamic_rotate %8 by %c8_i32 dim 1 : vector<16x256xf32>, i32 -> vector<16x256xf32>
    %121 = vector.extract_strided_slice %9 {offsets = [2, 0], sizes = [1, 256], strides = [1, 1]} : vector<6x256xf32> to vector<1x256xf32>
    %122 = vector.broadcast %121 : vector<1x256xf32> to vector<16x256xf32>
    %123 = arith.mulf %120, %122 : vector<16x256xf32>
    %124 = vector.extract_strided_slice %10 {offsets = [0, 10], sizes = [16, 1], strides = [1, 1]} : vector<16x27xf32> to vector<16x1xf32>
    %125 = vector.broadcast %124 : vector<16x1xf32> to vector<16x256xf32>
    %126 = arith.mulf %123, %125 : vector<16x256xf32>
    %127 = arith.addf %119, %126 : vector<16x256xf32>
    %c7_i32 = arith.constant 7 : i32
    %128 = tpu.dynamic_rotate %8 by %c7_i32 dim 1 : vector<16x256xf32>, i32 -> vector<16x256xf32>
    %129 = vector.extract_strided_slice %9 {offsets = [2, 0], sizes = [1, 256], strides = [1, 1]} : vector<6x256xf32> to vector<1x256xf32>
    %130 = vector.extract_strided_slice %9 {offsets = [5, 0], sizes = [1, 256], strides = [1, 1]} : vector<6x256xf32> to vector<1x256xf32>
    %131 = arith.mulf %129, %130 : vector<1x256xf32>
    %132 = vector.broadcast %131 : vector<1x256xf32> to vector<16x256xf32>
    %133 = arith.mulf %128, %132 : vector<16x256xf32>
    %134 = vector.extract_strided_slice %10 {offsets = [0, 11], sizes = [16, 1], strides = [1, 1]} : vector<16x27xf32> to vector<16x1xf32>
    %135 = vector.broadcast %134 : vector<16x1xf32> to vector<16x256xf32>
    %136 = arith.mulf %133, %135 : vector<16x256xf32>
    %137 = arith.addf %127, %136 : vector<16x256xf32>
    %c1_i32 = arith.constant 1 : i32
    %138 = tpu.dynamic_rotate %8 by %c1_i32 dim 1 : vector<16x256xf32>, i32 -> vector<16x256xf32>
    %139 = vector.extract_strided_slice %9 {offsets = [4, 0], sizes = [1, 256], strides = [1, 1]} : vector<6x256xf32> to vector<1x256xf32>
    %140 = vector.broadcast %139 : vector<1x256xf32> to vector<16x256xf32>
    %141 = arith.mulf %138, %140 : vector<16x256xf32>
    %142 = vector.extract_strided_slice %10 {offsets = [0, 12], sizes = [16, 1], strides = [1, 1]} : vector<16x27xf32> to vector<16x1xf32>
    %143 = vector.broadcast %142 : vector<16x1xf32> to vector<16x256xf32>
    %144 = arith.mulf %141, %143 : vector<16x256xf32>
    %145 = arith.addf %137, %144 : vector<16x256xf32>
    %c255_i32 = arith.constant 255 : i32
    %146 = tpu.dynamic_rotate %8 by %c255_i32 dim 1 : vector<16x256xf32>, i32 -> vector<16x256xf32>
    %147 = vector.extract_strided_slice %9 {offsets = [5, 0], sizes = [1, 256], strides = [1, 1]} : vector<6x256xf32> to vector<1x256xf32>
    %148 = vector.broadcast %147 : vector<1x256xf32> to vector<16x256xf32>
    %149 = arith.mulf %146, %148 : vector<16x256xf32>
    %150 = vector.extract_strided_slice %10 {offsets = [0, 14], sizes = [16, 1], strides = [1, 1]} : vector<16x27xf32> to vector<16x1xf32>
    %151 = vector.broadcast %150 : vector<16x1xf32> to vector<16x256xf32>
    %152 = arith.mulf %149, %151 : vector<16x256xf32>
    %153 = arith.addf %145, %152 : vector<16x256xf32>
    %c249_i32 = arith.constant 249 : i32
    %154 = tpu.dynamic_rotate %8 by %c249_i32 dim 1 : vector<16x256xf32>, i32 -> vector<16x256xf32>
    %155 = vector.extract_strided_slice %9 {offsets = [3, 0], sizes = [1, 256], strides = [1, 1]} : vector<6x256xf32> to vector<1x256xf32>
    %156 = vector.extract_strided_slice %9 {offsets = [4, 0], sizes = [1, 256], strides = [1, 1]} : vector<6x256xf32> to vector<1x256xf32>
    %157 = arith.mulf %155, %156 : vector<1x256xf32>
    %158 = vector.broadcast %157 : vector<1x256xf32> to vector<16x256xf32>
    %159 = arith.mulf %154, %158 : vector<16x256xf32>
    %160 = vector.extract_strided_slice %10 {offsets = [0, 15], sizes = [16, 1], strides = [1, 1]} : vector<16x27xf32> to vector<16x1xf32>
    %161 = vector.broadcast %160 : vector<16x1xf32> to vector<16x256xf32>
    %162 = arith.mulf %159, %161 : vector<16x256xf32>
    %163 = arith.addf %153, %162 : vector<16x256xf32>
    %c248_i32 = arith.constant 248 : i32
    %164 = tpu.dynamic_rotate %8 by %c248_i32 dim 1 : vector<16x256xf32>, i32 -> vector<16x256xf32>
    %165 = vector.extract_strided_slice %9 {offsets = [3, 0], sizes = [1, 256], strides = [1, 1]} : vector<6x256xf32> to vector<1x256xf32>
    %166 = vector.broadcast %165 : vector<1x256xf32> to vector<16x256xf32>
    %167 = arith.mulf %164, %166 : vector<16x256xf32>
    %168 = vector.extract_strided_slice %10 {offsets = [0, 16], sizes = [16, 1], strides = [1, 1]} : vector<16x27xf32> to vector<16x1xf32>
    %169 = vector.broadcast %168 : vector<16x1xf32> to vector<16x256xf32>
    %170 = arith.mulf %167, %169 : vector<16x256xf32>
    %171 = arith.addf %163, %170 : vector<16x256xf32>
    %c247_i32 = arith.constant 247 : i32
    %172 = tpu.dynamic_rotate %8 by %c247_i32 dim 1 : vector<16x256xf32>, i32 -> vector<16x256xf32>
    %173 = vector.extract_strided_slice %9 {offsets = [3, 0], sizes = [1, 256], strides = [1, 1]} : vector<6x256xf32> to vector<1x256xf32>
    %174 = vector.extract_strided_slice %9 {offsets = [5, 0], sizes = [1, 256], strides = [1, 1]} : vector<6x256xf32> to vector<1x256xf32>
    %175 = arith.mulf %173, %174 : vector<1x256xf32>
    %176 = vector.broadcast %175 : vector<1x256xf32> to vector<16x256xf32>
    %177 = arith.mulf %172, %176 : vector<16x256xf32>
    %178 = vector.extract_strided_slice %10 {offsets = [0, 17], sizes = [16, 1], strides = [1, 1]} : vector<16x27xf32> to vector<16x1xf32>
    %179 = vector.broadcast %178 : vector<16x1xf32> to vector<16x256xf32>
    %180 = arith.mulf %177, %179 : vector<16x256xf32>
    %181 = arith.addf %171, %180 : vector<16x256xf32>
    %c201_i32 = arith.constant 201 : i32
    %182 = tpu.dynamic_rotate %8 by %c201_i32 dim 1 : vector<16x256xf32>, i32 -> vector<16x256xf32>
    %183 = vector.extract_strided_slice %9 {offsets = [1, 0], sizes = [1, 256], strides = [1, 1]} : vector<6x256xf32> to vector<1x256xf32>
    %184 = vector.extract_strided_slice %9 {offsets = [2, 0], sizes = [1, 256], strides = [1, 1]} : vector<6x256xf32> to vector<1x256xf32>
    %185 = arith.mulf %183, %184 : vector<1x256xf32>
    %186 = vector.extract_strided_slice %9 {offsets = [4, 0], sizes = [1, 256], strides = [1, 1]} : vector<6x256xf32> to vector<1x256xf32>
    %187 = arith.mulf %185, %186 : vector<1x256xf32>
    %188 = vector.broadcast %187 : vector<1x256xf32> to vector<16x256xf32>
    %189 = arith.mulf %182, %188 : vector<16x256xf32>
    %190 = vector.extract_strided_slice %10 {offsets = [0, 18], sizes = [16, 1], strides = [1, 1]} : vector<16x27xf32> to vector<16x1xf32>
    %191 = vector.broadcast %190 : vector<16x1xf32> to vector<16x256xf32>
    %192 = arith.mulf %189, %191 : vector<16x256xf32>
    %193 = arith.addf %181, %192 : vector<16x256xf32>
    %c200_i32 = arith.constant 200 : i32
    %194 = tpu.dynamic_rotate %8 by %c200_i32 dim 1 : vector<16x256xf32>, i32 -> vector<16x256xf32>
    %195 = vector.extract_strided_slice %9 {offsets = [1, 0], sizes = [1, 256], strides = [1, 1]} : vector<6x256xf32> to vector<1x256xf32>
    %196 = vector.extract_strided_slice %9 {offsets = [2, 0], sizes = [1, 256], strides = [1, 1]} : vector<6x256xf32> to vector<1x256xf32>
    %197 = arith.mulf %195, %196 : vector<1x256xf32>
    %198 = vector.broadcast %197 : vector<1x256xf32> to vector<16x256xf32>
    %199 = arith.mulf %194, %198 : vector<16x256xf32>
    %200 = vector.extract_strided_slice %10 {offsets = [0, 19], sizes = [16, 1], strides = [1, 1]} : vector<16x27xf32> to vector<16x1xf32>
    %201 = vector.broadcast %200 : vector<16x1xf32> to vector<16x256xf32>
    %202 = arith.mulf %199, %201 : vector<16x256xf32>
    %203 = arith.addf %193, %202 : vector<16x256xf32>
    %c199_i32 = arith.constant 199 : i32
    %204 = tpu.dynamic_rotate %8 by %c199_i32 dim 1 : vector<16x256xf32>, i32 -> vector<16x256xf32>
    %205 = vector.extract_strided_slice %9 {offsets = [1, 0], sizes = [1, 256], strides = [1, 1]} : vector<6x256xf32> to vector<1x256xf32>
    %206 = vector.extract_strided_slice %9 {offsets = [2, 0], sizes = [1, 256], strides = [1, 1]} : vector<6x256xf32> to vector<1x256xf32>
    %207 = arith.mulf %205, %206 : vector<1x256xf32>
    %208 = vector.extract_strided_slice %9 {offsets = [5, 0], sizes = [1, 256], strides = [1, 1]} : vector<6x256xf32> to vector<1x256xf32>
    %209 = arith.mulf %207, %208 : vector<1x256xf32>
    %210 = vector.broadcast %209 : vector<1x256xf32> to vector<16x256xf32>
    %211 = arith.mulf %204, %210 : vector<16x256xf32>
    %212 = vector.extract_strided_slice %10 {offsets = [0, 20], sizes = [16, 1], strides = [1, 1]} : vector<16x27xf32> to vector<16x1xf32>
    %213 = vector.broadcast %212 : vector<16x1xf32> to vector<16x256xf32>
    %214 = arith.mulf %211, %213 : vector<16x256xf32>
    %215 = arith.addf %203, %214 : vector<16x256xf32>
    %c193_i32 = arith.constant 193 : i32
    %216 = tpu.dynamic_rotate %8 by %c193_i32 dim 1 : vector<16x256xf32>, i32 -> vector<16x256xf32>
    %217 = vector.extract_strided_slice %9 {offsets = [1, 0], sizes = [1, 256], strides = [1, 1]} : vector<6x256xf32> to vector<1x256xf32>
    %218 = vector.extract_strided_slice %9 {offsets = [4, 0], sizes = [1, 256], strides = [1, 1]} : vector<6x256xf32> to vector<1x256xf32>
    %219 = arith.mulf %217, %218 : vector<1x256xf32>
    %220 = vector.broadcast %219 : vector<1x256xf32> to vector<16x256xf32>
    %221 = arith.mulf %216, %220 : vector<16x256xf32>
    %222 = vector.extract_strided_slice %10 {offsets = [0, 21], sizes = [16, 1], strides = [1, 1]} : vector<16x27xf32> to vector<16x1xf32>
    %223 = vector.broadcast %222 : vector<16x1xf32> to vector<16x256xf32>
    %224 = arith.mulf %221, %223 : vector<16x256xf32>
    %225 = arith.addf %215, %224 : vector<16x256xf32>
    %c192_i32 = arith.constant 192 : i32
    %226 = tpu.dynamic_rotate %8 by %c192_i32 dim 1 : vector<16x256xf32>, i32 -> vector<16x256xf32>
    %227 = vector.extract_strided_slice %9 {offsets = [1, 0], sizes = [1, 256], strides = [1, 1]} : vector<6x256xf32> to vector<1x256xf32>
    %228 = vector.broadcast %227 : vector<1x256xf32> to vector<16x256xf32>
    %229 = arith.mulf %226, %228 : vector<16x256xf32>
    %230 = vector.extract_strided_slice %10 {offsets = [0, 22], sizes = [16, 1], strides = [1, 1]} : vector<16x27xf32> to vector<16x1xf32>
    %231 = vector.broadcast %230 : vector<16x1xf32> to vector<16x256xf32>
    %232 = arith.mulf %229, %231 : vector<16x256xf32>
    %233 = arith.addf %225, %232 : vector<16x256xf32>
    %c191_i32 = arith.constant 191 : i32
    %234 = tpu.dynamic_rotate %8 by %c191_i32 dim 1 : vector<16x256xf32>, i32 -> vector<16x256xf32>
    %235 = vector.extract_strided_slice %9 {offsets = [1, 0], sizes = [1, 256], strides = [1, 1]} : vector<6x256xf32> to vector<1x256xf32>
    %236 = vector.extract_strided_slice %9 {offsets = [5, 0], sizes = [1, 256], strides = [1, 1]} : vector<6x256xf32> to vector<1x256xf32>
    %237 = arith.mulf %235, %236 : vector<1x256xf32>
    %238 = vector.broadcast %237 : vector<1x256xf32> to vector<16x256xf32>
    %239 = arith.mulf %234, %238 : vector<16x256xf32>
    %240 = vector.extract_strided_slice %10 {offsets = [0, 23], sizes = [16, 1], strides = [1, 1]} : vector<16x27xf32> to vector<16x1xf32>
    %241 = vector.broadcast %240 : vector<16x1xf32> to vector<16x256xf32>
    %242 = arith.mulf %239, %241 : vector<16x256xf32>
    %243 = arith.addf %233, %242 : vector<16x256xf32>
    %c185_i32 = arith.constant 185 : i32
    %244 = tpu.dynamic_rotate %8 by %c185_i32 dim 1 : vector<16x256xf32>, i32 -> vector<16x256xf32>
    %245 = vector.extract_strided_slice %9 {offsets = [1, 0], sizes = [1, 256], strides = [1, 1]} : vector<6x256xf32> to vector<1x256xf32>
    %246 = vector.extract_strided_slice %9 {offsets = [3, 0], sizes = [1, 256], strides = [1, 1]} : vector<6x256xf32> to vector<1x256xf32>
    %247 = arith.mulf %245, %246 : vector<1x256xf32>
    %248 = vector.extract_strided_slice %9 {offsets = [4, 0], sizes = [1, 256], strides = [1, 1]} : vector<6x256xf32> to vector<1x256xf32>
    %249 = arith.mulf %247, %248 : vector<1x256xf32>
    %250 = vector.broadcast %249 : vector<1x256xf32> to vector<16x256xf32>
    %251 = arith.mulf %244, %250 : vector<16x256xf32>
    %252 = vector.extract_strided_slice %10 {offsets = [0, 24], sizes = [16, 1], strides = [1, 1]} : vector<16x27xf32> to vector<16x1xf32>
    %253 = vector.broadcast %252 : vector<16x1xf32> to vector<16x256xf32>
    %254 = arith.mulf %251, %253 : vector<16x256xf32>
    %255 = arith.addf %243, %254 : vector<16x256xf32>
    %c184_i32 = arith.constant 184 : i32
    %256 = tpu.dynamic_rotate %8 by %c184_i32 dim 1 : vector<16x256xf32>, i32 -> vector<16x256xf32>
    %257 = vector.extract_strided_slice %9 {offsets = [1, 0], sizes = [1, 256], strides = [1, 1]} : vector<6x256xf32> to vector<1x256xf32>
    %258 = vector.extract_strided_slice %9 {offsets = [3, 0], sizes = [1, 256], strides = [1, 1]} : vector<6x256xf32> to vector<1x256xf32>
    %259 = arith.mulf %257, %258 : vector<1x256xf32>
    %260 = vector.broadcast %259 : vector<1x256xf32> to vector<16x256xf32>
    %261 = arith.mulf %256, %260 : vector<16x256xf32>
    %262 = vector.extract_strided_slice %10 {offsets = [0, 25], sizes = [16, 1], strides = [1, 1]} : vector<16x27xf32> to vector<16x1xf32>
    %263 = vector.broadcast %262 : vector<16x1xf32> to vector<16x256xf32>
    %264 = arith.mulf %261, %263 : vector<16x256xf32>
    %265 = arith.addf %255, %264 : vector<16x256xf32>
    %c183_i32 = arith.constant 183 : i32
    %266 = tpu.dynamic_rotate %8 by %c183_i32 dim 1 : vector<16x256xf32>, i32 -> vector<16x256xf32>
    %267 = vector.extract_strided_slice %9 {offsets = [1, 0], sizes = [1, 256], strides = [1, 1]} : vector<6x256xf32> to vector<1x256xf32>
    %268 = vector.extract_strided_slice %9 {offsets = [3, 0], sizes = [1, 256], strides = [1, 1]} : vector<6x256xf32> to vector<1x256xf32>
    %269 = arith.mulf %267, %268 : vector<1x256xf32>
    %270 = vector.extract_strided_slice %9 {offsets = [5, 0], sizes = [1, 256], strides = [1, 1]} : vector<6x256xf32> to vector<1x256xf32>
    %271 = arith.mulf %269, %270 : vector<1x256xf32>
    %272 = vector.broadcast %271 : vector<1x256xf32> to vector<16x256xf32>
    %273 = arith.mulf %266, %272 : vector<16x256xf32>
    %274 = vector.extract_strided_slice %10 {offsets = [0, 26], sizes = [16, 1], strides = [1, 1]} : vector<16x27xf32> to vector<16x1xf32>
    %275 = vector.broadcast %274 : vector<16x1xf32> to vector<16x256xf32>
    %276 = arith.mulf %273, %275 : vector<16x256xf32>
    %277 = arith.addf %265, %276 : vector<16x256xf32>
    %c0_11 = arith.constant 0 : index
    %c0_12 = arith.constant 0 : index
    %278 = vector.load %arg6[%c0_11, %c0_12] : memref<16x1xf32, #tpu.memory_space<vmem>>, vector<16x1xf32>
    %279 = vector.broadcast %278 : vector<16x1xf32> to vector<16x256xf32>
    %280 = arith.addf %277, %279 : vector<16x256xf32>
    %cst_13 = arith.constant dense<0.000000e+00> : vector<16xf32>
    %281 = vector.multi_reduction <add>, %280, %cst_13 [1] : vector<16x256xf32> to vector<16xf32>
    %282 = vector.shape_cast %281 : vector<16xf32> to vector<16x1xf32>
    %cst_14 = arith.constant 3.906250e-03 : f32
    %283 = vector.broadcast %cst_14 : f32 to vector<16x1xf32>
    %284 = arith.mulf %282, %283 : vector<16x1xf32>
    %c0_15 = arith.constant 0 : index
    %c0_16 = arith.constant 0 : index
    %285 = vector.load %arg7[%c0_15, %c0_16] : memref<16x8xf32, #tpu.memory_space<vmem>>, vector<16x8xf32>
    %286 = vector.broadcast %284 : vector<16x1xf32> to vector<16x8xf32>
    %287 = arith.mulf %285, %286 : vector<16x8xf32>
    %cst_17 = arith.constant dense<0.000000e+00> : vector<8xf32>
    %288 = vector.multi_reduction <add>, %287, %cst_17 [0] : vector<16x8xf32> to vector<8xf32>
    %289 = vector.shape_cast %288 : vector<8xf32> to vector<1x8xf32>
    %c0_18 = arith.constant 0 : index
    %c0_19 = arith.constant 0 : index
    %290 = vector.load %arg8[%c0_18, %c0_19] : memref<1x8xf32, #tpu.memory_space<vmem>>, vector<1x8xf32>
    %291 = arith.addf %289, %290 : vector<1x8xf32>
    %cst_20 = arith.constant 0.000000e+00 : f32
    %292 = vector.broadcast %cst_20 : f32 to vector<1x8xf32>
    %293 = arith.maximumf %291, %292 : vector<1x8xf32>
    %c0_21 = arith.constant 0 : index
    %c0_22 = arith.constant 0 : index
    %294 = vector.load %arg9[%c0_21, %c0_22] : memref<16x8xf32, #tpu.memory_space<vmem>>, vector<16x8xf32>
    %295 = vector.broadcast %293 : vector<1x8xf32> to vector<16x8xf32>
    %296 = arith.mulf %294, %295 : vector<16x8xf32>
    %cst_23 = arith.constant dense<0.000000e+00> : vector<16xf32>
    %297 = vector.multi_reduction <add>, %296, %cst_23 [1] : vector<16x8xf32> to vector<16xf32>
    %298 = vector.shape_cast %297 : vector<16xf32> to vector<16x1xf32>
    %c0_24 = arith.constant 0 : index
    %c0_25 = arith.constant 0 : index
    %299 = vector.load %arg10[%c0_24, %c0_25] : memref<16x1xf32, #tpu.memory_space<vmem>>, vector<16x1xf32>
    %300 = arith.addf %298, %299 : vector<16x1xf32>
    %301 = arith.negf %300 : vector<16x1xf32>
    %302 = math.exp %301 : vector<16x1xf32>
    %cst_26 = arith.constant 1.000000e+00 : f32
    %303 = vector.broadcast %cst_26 : f32 to vector<16x1xf32>
    %304 = arith.addf %303, %302 : vector<16x1xf32>
    %305 = arith.divf %303, %304 : vector<16x1xf32>
    %306 = vector.broadcast %305 : vector<16x1xf32> to vector<16x256xf32>
    %307 = arith.mulf %280, %306 : vector<16x256xf32>
    %308 = arith.negf %307 : vector<16x256xf32>
    %309 = math.exp %308 : vector<16x256xf32>
    %cst_27 = arith.constant 1.000000e+00 : f32
    %310 = vector.broadcast %cst_27 : f32 to vector<16x256xf32>
    %311 = arith.addf %310, %309 : vector<16x256xf32>
    %312 = arith.divf %310, %311 : vector<16x256xf32>
    %313 = arith.mulf %307, %312 : vector<16x256xf32>
    %c0_28 = arith.constant 0 : index
    %c0_29 = arith.constant 0 : index
    %314 = vector.load %arg11[%c0_28, %c0_29] : memref<16x16xf32, #tpu.memory_space<vmem>>, vector<16x16xf32>
    %cst_30 = arith.constant dense<0.000000e+00> : vector<16x256xf32>
    %315 = tpu.matmul %314, %313, %cst_30 {dimension_numbers = #tpu.dot_dimension_numbers<[1], [0], [0], [1], [0, 0, 1, 1], [], []>} : vector<16x16xf32>, vector<16x256xf32>, vector<16x256xf32> -> vector<16x256xf32>
    %c0_31 = arith.constant 0 : index
    %c0_32 = arith.constant 0 : index
    %316 = vector.load %arg12[%c0_31, %c0_32] : memref<16x1xf32, #tpu.memory_space<vmem>>, vector<16x1xf32>
    %317 = vector.broadcast %316 : vector<16x1xf32> to vector<16x256xf32>
    %318 = arith.addf %315, %317 : vector<16x256xf32>
    %319 = arith.addf %318, %1 : vector<16x256xf32>
    %cst_33 = arith.constant 0.000000e+00 : f32
    %320 = vector.broadcast %cst_33 : f32 to vector<16x256xf32>
    %321 = arith.maximumf %319, %320 : vector<16x256xf32>
    %c0_34 = arith.constant 0 : index
    %c0_35 = arith.constant 0 : index
    %c0_36 = arith.constant 0 : index
    %322 = vector.load %arg13[%c0_34, %c0_35, %c0_36] : memref<1x16x256xf32, #tpu.memory_space<vmem>>, vector<1x16x256xf32>
    %323 = vector.shape_cast %322 : vector<1x16x256xf32> to vector<16x256xf32>
    %324 = vector.shape_cast %321 : vector<16x256xf32> to vector<1x16x256xf32>
    tpu.vector_store %arg13[%c0_34, %c0_35, %c0_36], %324 {strides = array<i32>} : memref<1x16x256xf32, #tpu.memory_space<vmem>>, vector<1x16x256xf32>,
    return
  }
  func.func @transform_0(%arg0: i32) -> (i32, i32, i32) {
    %c0_i32 = arith.constant 0 : i32
    %c0_i32_0 = arith.constant 0 : i32
    %c0_i32_1 = arith.constant 0 : i32
    return %arg0, %c0_i32, %c0_i32_0 : i32, i32, i32
  }
  func.func @transform_1(%arg0: i32) -> (i32, i32) {
    %c0_i32 = arith.constant 0 : i32
    %c0_i32_0 = arith.constant 0 : i32
    %c0_i32_1 = arith.constant 0 : i32
    return %c0_i32, %c0_i32_0 : i32, i32
  }
  func.func @transform_2(%arg0: i32) -> (i32, i32) {
    %c0_i32 = arith.constant 0 : i32
    %c0_i32_0 = arith.constant 0 : i32
    %c0_i32_1 = arith.constant 0 : i32
    return %c0_i32, %c0_i32_0 : i32, i32
  }
  func.func @transform_3(%arg0: i32) -> (i32, i32) {
    %c0_i32 = arith.constant 0 : i32
    %c0_i32_0 = arith.constant 0 : i32
    %c0_i32_1 = arith.constant 0 : i32
    return %c0_i32, %c0_i32_0 : i32, i32
  }
  func.func @transform_4(%arg0: i32) -> (i32, i32) {
    %c0_i32 = arith.constant 0 : i32
    %c0_i32_0 = arith.constant 0 : i32
    %c0_i32_1 = arith.constant 0 : i32
    return %c0_i32, %c0_i32_0 : i32, i32
  }
  func.func @transform_5(%arg0: i32) -> (i32, i32) {
    %c0_i32 = arith.constant 0 : i32
    %c0_i32_0 = arith.constant 0 : i32
    %c0_i32_1 = arith.constant 0 : i32
    return %c0_i32, %c0_i32_0 : i32, i32
  }
  func.func @transform_6(%arg0: i32) -> (i32, i32) {
    %c0_i32 = arith.constant 0 : i32
    %c0_i32_0 = arith.constant 0 : i32
    %c0_i32_1 = arith.constant 0 : i32
    return %c0_i32, %c0_i32_0 : i32, i32
  }
  func.func @transform_7(%arg0: i32) -> (i32, i32) {
    %c0_i32 = arith.constant 0 : i32
    %c0_i32_0 = arith.constant 0 : i32
    %c0_i32_1 = arith.constant 0 : i32
    return %c0_i32, %c0_i32_0 : i32, i32
  }
  func.func @transform_8(%arg0: i32) -> (i32, i32) {
    %c0_i32 = arith.constant 0 : i32
    %c0_i32_0 = arith.constant 0 : i32
    %c0_i32_1 = arith.constant 0 : i32
    return %c0_i32, %c0_i32_0 : i32, i32
  }
  func.func @transform_9(%arg0: i32) -> (i32, i32) {
    %c0_i32 = arith.constant 0 : i32
    %c0_i32_0 = arith.constant 0 : i32
    %c0_i32_1 = arith.constant 0 : i32
    return %c0_i32, %c0_i32_0 : i32, i32
  }
  func.func @transform_10(%arg0: i32) -> (i32, i32) {
    %c0_i32 = arith.constant 0 : i32
    %c0_i32_0 = arith.constant 0 : i32
    %c0_i32_1 = arith.constant 0 : i32
    return %c0_i32, %c0_i32_0 : i32, i32
  }
  func.func @transform_11(%arg0: i32) -> (i32, i32) {
    %c0_i32 = arith.constant 0 : i32
    %c0_i32_0 = arith.constant 0 : i32
    %c0_i32_1 = arith.constant 0 : i32
    return %c0_i32, %c0_i32_0 : i32, i32
  }
  func.func @transform_12(%arg0: i32) -> (i32, i32, i32) {
    %c0_i32 = arith.constant 0 : i32
    %c0_i32_0 = arith.constant 0 : i32
    %c0_i32_1 = arith.constant 0 : i32
    return %arg0, %c0_i32, %c0_i32_0 : i32, i32, i32
  }
}

</mosaic_0001>

<llo_original>
// kernel: bottleneck_forward.1
$region0: #{bottleneck_forward.1}
  #allocation0 [shape = 'u32[]', space=smem, size = 0x4, offset = 0x4, fixed_abs, tag = 'smem constant byte address 0x4 - core index']
  #allocation1 [shape = 'u32[144,128]{1,0:T(1,128)}', space=vmem, size = 0x12000, scoped, tag = 'internal scratch']
  %s0 = inlined_call_operand.vmem [shape: f32[2,16,256], index: 0, kind: input, shape index: {}]
  %s1 = inlined_call_operand.vmem [shape: f32[6,256], index: 1, kind: input, shape index: {}]
  %s2 = inlined_call_operand.vmem [shape: f32[16,16], index: 2, kind: input, shape index: {}]
  %s3 = inlined_call_operand.vmem [shape: f32[16,1], index: 3, kind: input, shape index: {}]
  %s4 = inlined_call_operand.vmem [shape: f32[16,27], index: 4, kind: input, shape index: {}]
  %s5 = inlined_call_operand.vmem [shape: f32[16,1], index: 5, kind: input, shape index: {}]
  %s6 = inlined_call_operand.vmem [shape: f32[16,8], index: 6, kind: input, shape index: {}]
  %s7 = inlined_call_operand.vmem [shape: f32[1,8], index: 7, kind: input, shape index: {}]
  %s8 = inlined_call_operand.vmem [shape: f32[16,8], index: 8, kind: input, shape index: {}]
  %s9 = inlined_call_operand.vmem [shape: f32[16,1], index: 9, kind: input, shape index: {}]
  %s10 = inlined_call_operand.vmem [shape: f32[16,16], index: 10, kind: input, shape index: {}]
  %s11 = inlined_call_operand.vmem [shape: f32[16,1], index: 11, kind: input, shape index: {}]
  %s12 = inlined_call_operand.vmem [shape: f32[2,16,256], index: 12, kind: output, shape index: {}]
  %s13 = sld [smem:[#allocation0]]
  $region81: #{bottleneck_forward.1} parent=0
    _
  %s15 = ssub.s32 1, %s13
  %s16 = scalar_select 0, %s15, %s13
  loop: start=0, step=1, limit=4
  $region2: #{bottleneck_forward.1} parent=0 // loop_pre_header
    _
  $region3: #{bottleneck_forward.1} parent=0 // loop_header
    %s18 = sphi 0, %s22
    %p19 = scmp.ge.s32.totalorder %s18, 4
    %s28 = sphi 0, %s30
    %s31 = sphi 0, %s28
    %s32 = sphi 0, %s31
    %s48 = sphi 0, %s32
    %s52 = sphi 0, %s52
    %s54 = sphi 0, %s52
    %s55 = sphi 0, %s54
    %s69 = sphi 0, %s55
    %s73 = sphi 0, %s73
    %s75 = sphi 0, %s73
    %s76 = sphi 0, %s75
    %s90 = sphi 0, %s76
    %s94 = sphi 0, %s94
    %s96 = sphi 0, %s94
    %s97 = sphi 0, %s96
    %s111 = sphi 0, %s97
    %s115 = sphi 0, %s115
    %s117 = sphi 0, %s115
    %s118 = sphi 0, %s117
    %s132 = sphi 0, %s118
    %s136 = sphi 0, %s136
    %s138 = sphi 0, %s136
    %s139 = sphi 0, %s138
    %s153 = sphi 0, %s139
    %s157 = sphi 0, %s157
    %s159 = sphi 0, %s157
    %s160 = sphi 0, %s159
    %s174 = sphi 0, %s160
    %s178 = sphi 0, %s178
    %s180 = sphi 0, %s178
    %s181 = sphi 0, %s180
    %s195 = sphi 0, %s181
    %s199 = sphi 0, %s199
    %s201 = sphi 0, %s199
    %s202 = sphi 0, %s201
    %s216 = sphi 0, %s202
    %s220 = sphi 0, %s220
    %s222 = sphi 0, %s220
    %s223 = sphi 0, %s222
    %s237 = sphi 0, %s223
    %s241 = sphi 0, %s241
    %s243 = sphi 0, %s241
    %s244 = sphi 0, %s243
    %s258 = sphi 0, %s244
    %s262 = sphi 0, %s262
    %s264 = sphi 0, %s262
    %s265 = sphi 0, %s264
    %s279 = sphi 0, %s265
    %s285 = sphi 0, %s287
    %s288 = sphi 0, %s285
    %s289 = sphi 0, %s288
    %s305 = sphi 0, %s289
  $region4: #{bottleneck_forward.1} parent=0 // loop_header_branch
    %21 = sbr.rel (%p19) target = $region8
  $region5: #{bottleneck_forward.1} parent=0 // loop_body
    %s23 = ssub.s32 %s18, 1
    %s24 = ssub.s32 %s18, 2
    %s25 = sadd.s32 %s18, 1
    %s26 = ssub.s32 %s18, %s25
    %p27 = scmp.eq.s32.totalorder %s26, 0
    %s29 = sadd.s32 %s28, 1
    %s30 = scalar_select %p27, %s28, %s29
    %p33 = pneg %p27
    %p34 = scmp.eq.s32.totalorder %s18, 1
    %p35 = por %p33, %p34
    %p36 = scmp.ne.s32.totalorder %s28, %s31
    %p37 = scmp.eq.s32.totalorder %s18, 0
    %p38 = por %p36, %p37
    %p39 = scmp.ne.s32.totalorder %s28, %s31
    %p40 = scmp.eq.s32.totalorder %s23, 1
    %p41 = por %p39, %p40
    %p42 = scmp.ne.s32.totalorder %s31, %s32
    %p43 = scmp.eq.s32.totalorder %s23, 0
    %p44 = por %p42, %p43
    %p45 = scmp.ne.s32.totalorder %s31, %s32
    %p46 = scmp.eq.s32.totalorder %s24, 1
    %p47 = por %p45, %p46
    %p49 = scmp.ne.s32.totalorder %s32, %s48
    %p50 = scmp.eq.s32.totalorder %s24, 0
    %p51 = por %p49, %p50
    %s53 = sadd.s32 %s52, 1
    %p56 = scmp.eq.s32.totalorder %s18, 1
    %p57 = scmp.ne.s32.totalorder %s52, %s54
    %p58 = scmp.eq.s32.totalorder %s18, 0
    %p59 = por %p57, %p58
    %p60 = scmp.ne.s32.totalorder %s52, %s54
    %p61 = scmp.eq.s32.totalorder %s23, 1
    %p62 = por %p60, %p61
    %p63 = scmp.ne.s32.totalorder %s54, %s55
    %p64 = scmp.eq.s32.totalorder %s23, 0
    %p65 = por %p63, %p64
    %p66 = scmp.ne.s32.totalorder %s54, %s55
    %p67 = scmp.eq.s32.totalorder %s24, 1
    %p68 = por %p66, %p67
    %p70 = scmp.ne.s32.totalorder %s55, %s69
    %p71 = scmp.eq.s32.totalorder %s24, 0
    %p72 = por %p70, %p71
    %s74 = sadd.s32 %s73, 1
    %p77 = scmp.eq.s32.totalorder %s18, 1
    %p78 = scmp.ne.s32.totalorder %s73, %s75
    %p79 = scmp.eq.s32.totalorder %s18, 0
    %p80 = por %p78, %p79
    %p81 = scmp.ne.s32.totalorder %s73, %s75
    %p82 = scmp.eq.s32.totalorder %s23, 1
    %p83 = por %p81, %p82
    %p84 = scmp.ne.s32.totalorder %s75, %s76
    %p85 = scmp.eq.s32.totalorder %s23, 0
    %p86 = por %p84, %p85
    %p87 = scmp.ne.s32.totalorder %s75, %s76
    %p88 = scmp.eq.s32.totalorder %s24, 1
    %p89 = por %p87, %p88
    %p91 = scmp.ne.s32.totalorder %s76, %s90
    %p92 = scmp.eq.s32.totalorder %s24, 0
    %p93 = por %p91, %p92
    %s95 = sadd.s32 %s94, 1
    %p98 = scmp.eq.s32.totalorder %s18, 1
    %p99 = scmp.ne.s32.totalorder %s94, %s96
    %p100 = scmp.eq.s32.totalorder %s18, 0
    %p101 = por %p99, %p100
    %p102 = scmp.ne.s32.totalorder %s94, %s96
    %p103 = scmp.eq.s32.totalorder %s23, 1
    %p104 = por %p102, %p103
    %p105 = scmp.ne.s32.totalorder %s96, %s97
    %p106 = scmp.eq.s32.totalorder %s23, 0
    %p107 = por %p105, %p106
    %p108 = scmp.ne.s32.totalorder %s96, %s97
    %p109 = scmp.eq.s32.totalorder %s24, 1
    %p110 = por %p108, %p109
    %p112 = scmp.ne.s32.totalorder %s97, %s111
    %p113 = scmp.eq.s32.totalorder %s24, 0
    %p114 = por %p112, %p113
    %s116 = sadd.s32 %s115, 1
    %p119 = scmp.eq.s32.totalorder %s18, 1
    %p120 = scmp.ne.s32.totalorder %s115, %s117
    %p121 = scmp.eq.s32.totalorder %s18, 0
    %p122 = por %p120, %p121
    %p123 = scmp.ne.s32.totalorder %s115, %s117
    %p124 = scmp.eq.s32.totalorder %s23, 1
    %p125 = por %p123, %p124
    %p126 = scmp.ne.s32.totalorder %s117, %s118
    %p127 = scmp.eq.s32.totalorder %s23, 0
    %p128 = por %p126, %p127
    %p129 = scmp.ne.s32.totalorder %s117, %s118
    %p130 = scmp.eq.s32.totalorder %s24, 1
    %p131 = por %p129, %p130
    %p133 = scmp.ne.s32.totalorder %s118, %s132
    %p134 = scmp.eq.s32.totalorder %s24, 0
    %p135 = por %p133, %p134
    %s137 = sadd.s32 %s136, 1
    %p140 = scmp.eq.s32.totalorder %s18, 1
    %p141 = scmp.ne.s32.totalorder %s136, %s138
    %p142 = scmp.eq.s32.totalorder %s18, 0
    %p143 = por %p141, %p142
    %p144 = scmp.ne.s32.totalorder %s136, %s138
    %p145 = scmp.eq.s32.totalorder %s23, 1
    %p146 = por %p144, %p145
    %p147 = scmp.ne.s32.totalorder %s138, %s139
    %p148 = scmp.eq.s32.totalorder %s23, 0
    %p149 = por %p147, %p148
    %p150 = scmp.ne.s32.totalorder %s138, %s139
    %p151 = scmp.eq.s32.totalorder %s24, 1
    %p152 = por %p150, %p151
    %p154 = scmp.ne.s32.totalorder %s139, %s153
    %p155 = scmp.eq.s32.totalorder %s24, 0
    %p156 = por %p154, %p155
    %s158 = sadd.s32 %s157, 1
    %p161 = scmp.eq.s32.totalorder %s18, 1
    %p162 = scmp.ne.s32.totalorder %s157, %s159
    %p163 = scmp.eq.s32.totalorder %s18, 0
    %p164 = por %p162, %p163
    %p165 = scmp.ne.s32.totalorder %s157, %s159
    %p166 = scmp.eq.s32.totalorder %s23, 1
    %p167 = por %p165, %p166
    %p168 = scmp.ne.s32.totalorder %s159, %s160
    %p169 = scmp.eq.s32.totalorder %s23, 0
    %p170 = por %p168, %p169
    %p171 = scmp.ne.s32.totalorder %s159, %s160
    %p172 = scmp.eq.s32.totalorder %s24, 1
    %p173 = por %p171, %p172
    %p175 = scmp.ne.s32.totalorder %s160, %s174
    %p176 = scmp.eq.s32.totalorder %s24, 0
    %p177 = por %p175, %p176
    %s179 = sadd.s32 %s178, 1
    %p182 = scmp.eq.s32.totalorder %s18, 1
    %p183 = scmp.ne.s32.totalorder %s178, %s180
    %p184 = scmp.eq.s32.totalorder %s18, 0
    %p185 = por %p183, %p184
    %p186 = scmp.ne.s32.totalorder %s178, %s180
    %p187 = scmp.eq.s32.totalorder %s23, 1
    %p188 = por %p186, %p187
    %p189 = scmp.ne.s32.totalorder %s180, %s181
    %p190 = scmp.eq.s32.totalorder %s23, 0
    %p191 = por %p189, %p190
    %p192 = scmp.ne.s32.totalorder %s180, %s181
    %p193 = scmp.eq.s32.totalorder %s24, 1
    %p194 = por %p192, %p193
    %p196 = scmp.ne.s32.totalorder %s181, %s195
    %p197 = scmp.eq.s32.totalorder %s24, 0
    %p198 = por %p196, %p197
    %s200 = sadd.s32 %s199, 1
    %p203 = scmp.eq.s32.totalorder %s18, 1
    %p204 = scmp.ne.s32.totalorder %s199, %s201
    %p205 = scmp.eq.s32.totalorder %s18, 0
    %p206 = por %p204, %p205
    %p207 = scmp.ne.s32.totalorder %s199, %s201
    %p208 = scmp.eq.s32.totalorder %s23, 1
    %p209 = por %p207, %p208
    %p210 = scmp.ne.s32.totalorder %s201, %s202
    %p211 = scmp.eq.s32.totalorder %s23, 0
    %p212 = por %p210, %p211
    %p213 = scmp.ne.s32.totalorder %s201, %s202
    %p214 = scmp.eq.s32.totalorder %s24, 1
    %p215 = por %p213, %p214
    %p217 = scmp.ne.s32.totalorder %s202, %s216
    %p218 = scmp.eq.s32.totalorder %s24, 0
    %p219 = por %p217, %p218
    %s221 = sadd.s32 %s220, 1
    %p224 = scmp.eq.s32.totalorder %s18, 1
    %p225 = scmp.ne.s32.totalorder %s220, %s222
    %p226 = scmp.eq.s32.totalorder %s18, 0
    %p227 = por %p225, %p226
    %p228 = scmp.ne.s32.totalorder %s220, %s222
    %p229 = scmp.eq.s32.totalorder %s23, 1
    %p230 = por %p228, %p229
    %p231 = scmp.ne.s32.totalorder %s222, %s223
    %p232 = scmp.eq.s32.totalorder %s23, 0
    %p233 = por %p231, %p232
    %p234 = scmp.ne.s32.totalorder %s222, %s223
    %p235 = scmp.eq.s32.totalorder %s24, 1
    %p236 = por %p234, %p235
    %p238 = scmp.ne.s32.totalorder %s223, %s237
    %p239 = scmp.eq.s32.totalorder %s24, 0
    %p240 = por %p238, %p239
    %s242 = sadd.s32 %s241, 1
    %p245 = scmp.eq.s32.totalorder %s18, 1
    %p246 = scmp.ne.s32.totalorder %s241, %s243
    %p247 = scmp.eq.s32.totalorder %s18, 0
    %p248 = por %p246, %p247
    %p249 = scmp.ne.s32.totalorder %s241, %s243
    %p250 = scmp.eq.s32.totalorder %s23, 1
    %p251 = por %p249, %p250
    %p252 = scmp.ne.s32.totalorder %s243, %s244
    %p253 = scmp.eq.s32.totalorder %s23, 0
    %p254 = por %p252, %p253
    %p255 = scmp.ne.s32.totalorder %s243, %s244
    %p256 = scmp.eq.s32.totalorder %s24, 1
    %p257 = por %p255, %p256
    %p259 = scmp.ne.s32.totalorder %s244, %s258
    %p260 = scmp.eq.s32.totalorder %s24, 0
    %p261 = por %p259, %p260
    %s263 = sadd.s32 %s262, 1
    %p266 = scmp.eq.s32.totalorder %s18, 1
    %p267 = scmp.ne.s32.totalorder %s262, %s264
    %p268 = scmp.eq.s32.totalorder %s18, 0
    %p269 = por %p267, %p268
    %p270 = scmp.ne.s32.totalorder %s262, %s264
    %p271 = scmp.eq.s32.totalorder %s23, 1
    %p272 = por %p270, %p271
    %p273 = scmp.ne.s32.totalorder %s264, %s265
    %p274 = scmp.eq.s32.totalorder %s23, 0
    %p275 = por %p273, %p274
    %p276 = scmp.ne.s32.totalorder %s264, %s265
    %p277 = scmp.eq.s32.totalorder %s24, 1
    %p278 = por %p276, %p277
    %p280 = scmp.ne.s32.totalorder %s265, %s279
    %p281 = scmp.eq.s32.totalorder %s24, 0
    %p282 = por %p280, %p281
    %s283 = ssub.s32 %s18, %s25
    %p284 = scmp.eq.s32.totalorder %s283, 0
    %s286 = sadd.s32 %s285, 1
    %s287 = scalar_select %p284, %s285, %s286
    %p290 = pneg %p284
    %p291 = scmp.eq.s32.totalorder %s18, 1
    %p292 = por %p290, %p291
    %p293 = scmp.ne.s32.totalorder %s285, %s288
    %p294 = scmp.eq.s32.totalorder %s18, 0
    %p295 = por %p293, %p294
    %p296 = scmp.ne.s32.totalorder %s285, %s288
    %p297 = scmp.eq.s32.totalorder %s23, 1
    %p298 = por %p296, %p297
    %p299 = scmp.ne.s32.totalorder %s288, %s289
    %p300 = scmp.eq.s32.totalorder %s23, 0
    %p301 = por %p299, %p300
    %p302 = scmp.ne.s32.totalorder %s288, %s289
    %p303 = scmp.eq.s32.totalorder %s24, 1
    %p304 = por %p302, %p303
    %p306 = scmp.ne.s32.totalorder %s289, %s305
    %p307 = scmp.eq.s32.totalorder %s24, 0
    %p308 = por %p306, %p307
    %p309 = scmp.le.s32.totalorder 1, %s18
    %p310 = scmp.lt.s32.totalorder %s18, 3
    %p311 = pnand %p309, %p310
    %p312 = pneg %p311
    // Predicated region
    $region9: #{bottleneck_forward.1} parent=5 // pred_check
      _
    $region10: #{bottleneck_forward.1} parent=5 // pred_check_branch
      %314 = sbr.rel (%p311) target = $region12
    $region11: #{bottleneck_forward.1} parent=5 // pred_region
      %s315 = ssub.s32 %s18, 1
      // Predicated region
      $region13: #{bottleneck_forward.1} parent=11 // pred_check
        %p316 = pneg %p65
      $region14: #{bottleneck_forward.1} parent=11 // pred_check_branch
        %318 = sbr.rel (%p316) target = $region16
      $region15: #{bottleneck_forward.1} parent=11 // pred_region
        _
      $region16: #{bottleneck_forward.1} parent=11 // pred_fallthru
        _
      // Predicated region
      $region17: #{bottleneck_forward.1} parent=11 // pred_check
        %p319 = pneg %p86
      $region18: #{bottleneck_forward.1} parent=11 // pred_check_branch
        %321 = sbr.rel (%p319) target = $region20
      $region19: #{bottleneck_forward.1} parent=11 // pred_region
        _
      $region20: #{bottleneck_forward.1} parent=11 // pred_fallthru
        _
      // Predicated region
      $region21: #{bottleneck_forward.1} parent=11 // pred_check
        %p322 = pneg %p107
      $region22: #{bottleneck_forward.1} parent=11 // pred_check_branch
        %324 = sbr.rel (%p322) target = $region24
      $region23: #{bottleneck_forward.1} parent=11 // pred_region
        _
      $region24: #{bottleneck_forward.1} parent=11 // pred_fallthru
        _
      // Predicated region
      $region25: #{bottleneck_forward.1} parent=11 // pred_check
        %p325 = pneg %p128
      $region26: #{bottleneck_forward.1} parent=11 // pred_check_branch
        %327 = sbr.rel (%p325) target = $region28
      $region27: #{bottleneck_forward.1} parent=11 // pred_region
        _
      $region28: #{bottleneck_forward.1} parent=11 // pred_fallthru
        _
      // Predicated region
      $region29: #{bottleneck_forward.1} parent=11 // pred_check
        %p328 = pneg %p149
      $region30: #{bottleneck_forward.1} parent=11 // pred_check_branch
        %330 = sbr.rel (%p328) target = $region32
      $region31: #{bottleneck_forward.1} parent=11 // pred_region
        _
      $region32: #{bottleneck_forward.1} parent=11 // pred_fallthru
        _
      // Predicated region
      $region33: #{bottleneck_forward.1} parent=11 // pred_check
        %p331 = pneg %p170
      $region34: #{bottleneck_forward.1} parent=11 // pred_check_branch
        %333 = sbr.rel (%p331) target = $region36
      $region35: #{bottleneck_forward.1} parent=11 // pred_region
        _
      $region36: #{bottleneck_forward.1} parent=11 // pred_fallthru
        _
      // Predicated region
      $region37: #{bottleneck_forward.1} parent=11 // pred_check
        %p334 = pneg %p191
      $region38: #{bottleneck_forward.1} parent=11 // pred_check_branch
        %336 = sbr.rel (%p334) target = $region40
      $region39: #{bottleneck_forward.1} parent=11 // pred_region
        _
      $region40: #{bottleneck_forward.1} parent=11 // pred_fallthru
        _
      // Predicated region
      $region41: #{bottleneck_forward.1} parent=11 // pred_check
        %p337 = pneg %p212
      $region42: #{bottleneck_forward.1} parent=11 // pred_check_branch
        %339 = sbr.rel (%p337) target = $region44
      $region43: #{bottleneck_forward.1} parent=11 // pred_region
        _
      $region44: #{bottleneck_forward.1} parent=11 // pred_fallthru
        _
      // Predicated region
      $region45: #{bottleneck_forward.1} parent=11 // pred_check
        %p340 = pneg %p233
      $region46: #{bottleneck_forward.1} parent=11 // pred_check_branch
        %342 = sbr.rel (%p340) target = $region48
      $region47: #{bottleneck_forward.1} parent=11 // pred_region
        _
      $region48: #{bottleneck_forward.1} parent=11 // pred_fallthru
        _
      // Predicated region
      $region49: #{bottleneck_forward.1} parent=11 // pred_check
        %p343 = pneg %p254
      $region50: #{bottleneck_forward.1} parent=11 // pred_check_branch
        %345 = sbr.rel (%p343) target = $region52
      $region51: #{bottleneck_forward.1} parent=11 // pred_region
        _
      $region52: #{bottleneck_forward.1} parent=11 // pred_fallthru
        _
      // Predicated region
      $region53: #{bottleneck_forward.1} parent=11 // pred_check
        %p346 = pneg %p275
      $region54: #{bottleneck_forward.1} parent=11 // pred_check_branch
        %348 = sbr.rel (%p346) target = $region56
      $region55: #{bottleneck_forward.1} parent=11 // pred_region
        _
      $region56: #{bottleneck_forward.1} parent=11 // pred_fallthru
        _
    $region12: #{bottleneck_forward.1} parent=5 // pred_fallthru
      _
    %p349 = scmp.lt.s32.totalorder %s18, 2
    // Predicated region
    $region57: #{bottleneck_forward.1} parent=5 // pred_check
      %p350 = pneg %p349
    $region58: #{bottleneck_forward.1} parent=5 // pred_check_branch
      %352 = sbr.rel (%p350) target = $region60
    $region59: #{bottleneck_forward.1} parent=5 // pred_region
      // Predicated region
      $region61: #{bottleneck_forward.1} parent=59 // pred_check
        %p353 = pneg %p38
      $region62: #{bottleneck_forward.1} parent=59 // pred_check_branch
        %355 = sbr.rel (%p353) target = $region64
      $region63: #{bottleneck_forward.1} parent=59 // pred_region
        %p356 = scmp.lt.s32.totalorder %s18, 1
        %s357 = scalar_select %p356, %s18, 1
        %s358 = smul.addr %s357, 4
        %s359 = smul.addr %s358, 8
        %s360 = scalar_lea.vmem %s0, %s359
      $region64: #{bottleneck_forward.1} parent=59 // pred_fallthru
        _
    $region60: #{bottleneck_forward.1} parent=5 // pred_fallthru
      _
    %p361 = scmp.le.s32.totalorder 1, %s18
    %p362 = scmp.lt.s32.totalorder %s18, 3
    %p363 = pnand %p361, %p362
    %p364 = pneg %p363
    // Predicated region
    $region65: #{bottleneck_forward.1} parent=5 // pred_check
      _
    $region66: #{bottleneck_forward.1} parent=5 // pred_check_branch
      %366 = sbr.rel (%p363) target = $region68
    $region67: #{bottleneck_forward.1} parent=5 // pred_region
      %s367 = ssub.s32 %s18, 1
      %p368 = scmp.lt.s32.totalorder %s23, 1
      %s369 = scalar_select %p368, %s23, 1
      %s370 = smul.addr %s369, 4
      %s371 = smul.addr %s370, 8
      %s372 = scalar_lea.vmem %s0, %s371
      %p373 = pneg %p44
      %p374 = pneg %p41
      %p375 = pneg %p65
      %p376 = pneg %p62
      %p377 = pneg %p86
      %p378 = pneg %p83
      %p379 = pneg %p107
      %p380 = pneg %p104
      %p381 = pneg %p128
      %p382 = pneg %p125
      %p383 = pneg %p149
      %p384 = pneg %p146
      %p385 = pneg %p170
      %p386 = pneg %p167
      %p387 = pneg %p191
      %p388 = pneg %p188
      %p389 = pneg %p212
      %p390 = pneg %p209
      %p391 = pneg %p233
      %p392 = pneg %p230
      %p393 = pneg %p254
      %p394 = pneg %p251
      %p395 = pneg %p275
      %p396 = pneg %p272
      %p397 = pneg %p301
      %p398 = pneg %p298
      %p399 = scmp.lt.s32.totalorder %s23, 1
      %s400 = scalar_select %p399, %s23, 1
      %s401 = smul.addr %s400, 4
      %s402 = smul.addr %s401, 8
      %s403 = scalar_lea.vmem %s12, %s402
      %p404 = scmp.lt.s32.totalorder %s23, 1
      %s405 = scalar_select %p404, %s23, 1
      %s406 = smul.addr %s405, 4
      %s407 = smul.addr %s406, 8
      %s408 = scalar_lea.vmem %s0, %s407
      %p409 = scmp.lt.s32.totalorder %s23, 1
      %s410 = scalar_select %p409, %s23, 1
      %s411 = smul.addr %s410, 4
      %s412 = smul.addr %s411, 8
      %s413 = scalar_lea.vmem %s12, %s412
      %v414 = vld [vmem:[%s408] sm:$0xff]
      %v415 = vld [vmem:[%s408 + $0x8] sm:$0xff]
      %v416 = vld [vmem:[%s408 + $0x10] sm:$0xff]
      %v417 = vld [vmem:[%s408 + $0x18] sm:$0xff]
      %v418 = vld [vmem:[%s2] sm:$0xff]
      %v419 = vld [vmem:[%s2 + $0x8] sm:$0xff]
      %v420 = vld [vmem:[%s3] sm:$0xff]
      %v421 = vld [vmem:[%s3 + $0x8] sm:$0xff]
      %423 = vset.pattern.permute.xlu0 0
      %424 = vperm.xlu0 %423, %v420
      %v425 = vpop.permute.xlu0 %424
      %428 = vset.pattern.permute.xlu0 0
      %429 = vperm.xlu0 %428, %v421
      %v430 = vpop.permute.xlu0 %429
      %vm432 = vcmask 130048
      %v434 = vsel %vm432, %v418, 0
      %v437 = vsel %vm432, %v419, 0
      %439 = vmatprep.subr.mxu0 %v415
      %440 = vmatpush1.msra.mxu0 %v414
      %441 = vmatprep.subr.mxu0 %v417
      %442 = vmatpush1.msra.mxu0 %v416
      %443 = vmatprep.subr.mxu0 0.0
      %444 = vmatpush1.msra.mxu0 0.0
      %445 = vmatprep.subr.mxu0 0.0
      %446 = vmatpush1.msra.mxu0 0.0
      %447 = vmatprep.subr.mxu0 0.0
      %448 = vmatpush1.msra.mxu0 0.0
      %449 = vmatprep.subr.mxu0 0.0
      %450 = vmatpush1.msra.mxu0 0.0
      %451 = vmatprep.subr.mxu0 0.0
      %452 = vmatpush1.msra.mxu0 0.0
      %453 = vmatprep.subr.mxu0 0.0
      %454 = vmatpush1.msra.mxu0 0.0
      %455 = vmatprep.subr.mxu0 0.0
      %456 = vmatpush1.msra.mxu0 0.0
      %457 = vmatprep.subr.mxu0 0.0
      %458 = vmatpush1.msra.mxu0 0.0
      %459 = vmatprep.subr.mxu0 0.0
      %460 = vmatpush1.msra.mxu0 0.0
      %461 = vmatprep.subr.mxu0 0.0
      %462 = vmatpush1.msra.mxu0 0.0
      %463 = vmatprep.subr.mxu0 0.0
      %464 = vmatpush1.msra.mxu0 0.0
      %465 = vmatprep.subr.mxu0 0.0
      %466 = vmatpush1.msra.mxu0 0.0
      %467 = vmatprep.subr.mxu0 0.0
      %468 = vmatpush1.msra.mxu0 0.0
      %469 = vmatprep.subr.mxu0 0.0
      %470 = vmatpush1.msra.mxu0 0.0
      %471 = vmatprep.subr.mxu0 0.0
      %472 = vmatpush1.msra.mxu0 0.0
      %473 = vmatprep.subr.mxu0 0.0
      %474 = vmatpush1.msra.mxu0 0.0
      %475 = vmatprep.subr.mxu0 0.0
      %476 = vmatpush1.msra.mxu0 0.0
      %477 = vmatprep.subr.mxu0 0.0
      %478 = vmatpush1.msra.mxu0 0.0
      %479 = vmatprep.subr.mxu0 0.0
      %480 = vmatpush1.msra.mxu0 0.0
      %481 = vmatprep.subr.mxu0 0.0
      %482 = vmatpush1.msra.mxu0 0.0
      %483 = vmatprep.subr.mxu0 0.0
      %484 = vmatpush1.msra.mxu0 0.0
      %485 = vmatprep.subr.mxu0 0.0
      %486 = vmatpush1.msra.mxu0 0.0
      %487 = vmatprep.subr.mxu0 0.0
      %488 = vmatpush1.msra.mxu0 0.0
      %489 = vmatprep.subr.mxu0 0.0
      %490 = vmatpush1.msra.mxu0 0.0
      %491 = vmatprep.subr.mxu0 0.0
      %492 = vmatpush1.msra.mxu0 0.0
      %493 = vmatprep.subr.mxu0 0.0
      %494 = vmatpush1.msra.mxu0 0.0
      %495 = vmatprep.subr.mxu0 0.0
      %496 = vmatpush1.msra.mxu0 0.0
      %497 = vmatprep.subr.mxu0 0.0
      %498 = vmatpush1.msra.mxu0 0.0
      %499 = vmatprep.subr.mxu0 0.0
      %500 = vmatpush1.msra.mxu0 0.0
      %501 = vmatprep.subr.mxu0 0.0
      %502 = vmatpush1.msra.mxu0 0.0
      %503 = vmatprep.mubr.f32.mxu0 0.0
      %504 = vmatmul.mubr.f32.gmra.mrb[0].mxu0 %v434
      %v505 = vpop.f32.mrb[0].mxu0
      %v506 = vadd.f32 %v425, %v505
      %v507 = vpop.f32.mrb[0].mxu0
      %v508 = vadd.f32 %v425, %v507
      %509 = vmatprep.mubr.f32.mxu0 0.0
      %510 = vmatmul.mubr.f32.gmra.mrb[0].mxu0 %v437
      %v511 = vpop.f32.mrb[0].mxu0
      %v512 = vadd.f32 %v430, %v511
      %v513 = vpop.f32.mrb[0].mxu0
      %v514 = vadd.f32 %v430, %v513
      %515 = vdwg.mxu0
      %v516 = vmax.f32 %v506, 0.0
      %v517 = vmax.f32 %v508, 0.0
      %v518 = vmax.f32 %v512, 0.0
      %v519 = vmax.f32 %v514, 0.0
      %v520 = vld [vmem:[%s1] sm:$0x3f]
      %v521 = vld [vmem:[%s1 + $0x8] sm:$0x3f]
      %v522 = vld [vmem:[%s4] sm:$0xff]
      %v523 = vld [vmem:[%s4 + $0x8] sm:$0xff]
      %525 = vset.pattern.permute.xlu0 13
      %526 = vperm.xlu0 %525, %v522
      %v527 = vpop.permute.xlu0 %526
      %530 = vset.pattern.permute.xlu0 13
      %531 = vperm.xlu0 %530, %v523
      %v532 = vpop.permute.xlu0 %531
      %v534 = vmul.f32 %v516, %v527
      %v535 = vmul.f32 %v517, %v527
      %v536 = vmul.f32 %v518, %v532
      %v537 = vmul.f32 %v519, %v532
      %538 = vrot.lane.b32.xlu0 %v516, 73
      %v539 = vpop.permute.xlu0 %538
      %540 = vrot.lane.b32.xlu0 %v518, 73
      %v541 = vpop.permute.xlu0 %540
      %542 = vrot.lane.b32.xlu0 %v517, 73
      %v543 = vpop.permute.xlu0 %542
      %544 = vrot.lane.b32.xlu0 %v519, 73
      %v545 = vpop.permute.xlu0 %544
      %v546 = vlaneseq
      %v547 = vand.u32 %v546, 127
      %vm548 = vcmp.lt.s32.totalorder %v547, 73
      %v549 = vsel %vm548, %v539, %v543
      %v550 = vsel %vm548, %v541, %v545
      %v551 = vsel %vm548, %v543, %v539
      %v552 = vsel %vm548, %v545, %v541
      %v555 = vrot.slane %v520, 2
      %v556 = vrot.slane %v521, 2
      %v559 = vmul.f32 %v520, %v555
      %v560 = vmul.f32 %v521, %v556
      %v561 = vrot.slane %v520, 4
      %v562 = vrot.slane %v521, 4
      %v565 = vmul.f32 %v559, %v561
      %v566 = vmul.f32 %v560, %v562
      %v567 = vlaneseq
      %v568 = vshrl.u32 %v567, 7
      %v569 = vsub.s32 0, %v568
      %v570 = vrot.slane %v565, %v569
      %v571 = vlaneseq
      %v572 = vshrl.u32 %v571, 7
      %v573 = vsub.s32 0, %v572
      %v574 = vrot.slane %v566, %v573
      %v575 = vmul.f32 %v551, %v570
      %v576 = vmul.f32 %v549, %v574
      %v577 = vmul.f32 %v552, %v570
      %v578 = vmul.f32 %v550, %v574
      %579 = vset.pattern.permute.xlu0 0
      %580 = vperm.xlu0 %579, %v522
      %v581 = vpop.permute.xlu0 %580
      %583 = vset.pattern.permute.xlu0 0
      %584 = vperm.xlu0 %583, %v523
      %v585 = vpop.permute.xlu0 %584
      %v587 = vmul.f32 %v575, %v581
      %v588 = vmul.f32 %v576, %v581
      %v589 = vmul.f32 %v577, %v585
      %v590 = vmul.f32 %v578, %v585
      %v591 = vadd.f32 %v534, %v587
      %v592 = vadd.f32 %v535, %v588
      %v593 = vadd.f32 %v536, %v589
      %v594 = vadd.f32 %v537, %v590
      %595 = vrot.lane.b32.xlu0 %v516, 72
      %v596 = vpop.permute.xlu0 %595
      %597 = vrot.lane.b32.xlu0 %v518, 72
      %v598 = vpop.permute.xlu0 %597
      %599 = vrot.lane.b32.xlu0 %v517, 72
      %v600 = vpop.permute.xlu0 %599
      %601 = vrot.lane.b32.xlu0 %v519, 72
      %v602 = vpop.permute.xlu0 %601
      %vm603 = vcmp.lt.s32.totalorder %v547, 72
      %v604 = vsel %vm603, %v596, %v600
      %v605 = vsel %vm603, %v598, %v602
      %v606 = vsel %vm603, %v600, %v596
      %v607 = vsel %vm603, %v602, %v598
      %v608 = vlaneseq
      %v609 = vshrl.u32 %v608, 7
      %v610 = vsub.s32 0, %v609
      %v611 = vrot.slane %v559, %v610
      %v612 = vlaneseq
      %v613 = vshrl.u32 %v612, 7
      %v614 = vsub.s32 0, %v613
      %v615 = vrot.slane %v560, %v614
      %v616 = vmul.f32 %v606, %v611
      %v617 = vmul.f32 %v604, %v615
      %v618 = vmul.f32 %v607, %v611
      %v619 = vmul.f32 %v605, %v615
      %620 = vset.pattern.permute.xlu0 1
      %621 = vperm.xlu0 %620, %v522
      %v622 = vpop.permute.xlu0 %621
      %624 = vset.pattern.permute.xlu0 1
      %625 = vperm.xlu0 %624, %v523
      %v626 = vpop.permute.xlu0 %625
      %v628 = vmul.f32 %v616, %v622
      %v629 = vmul.f32 %v617, %v622
      %v630 = vmul.f32 %v618, %v626
      %v631 = vmul.f32 %v619, %v626
      %v632 = vadd.f32 %v591, %v628
      %v633 = vadd.f32 %v592, %v629
      %v634 = vadd.f32 %v593, %v630
      %v635 = vadd.f32 %v594, %v631
      %636 = vrot.lane.b32.xlu0 %v516, 71
      %v637 = vpop.permute.xlu0 %636
      %638 = vrot.lane.b32.xlu0 %v518, 71
      %v639 = vpop.permute.xlu0 %638
      %640 = vrot.lane.b32.xlu0 %v517, 71
      %v641 = vpop.permute.xlu0 %640
      %642 = vrot.lane.b32.xlu0 %v519, 71
      %v643 = vpop.permute.xlu0 %642
      %vm644 = vcmp.lt.s32.totalorder %v547, 71
      %v645 = vsel %vm644, %v637, %v641
      %v646 = vsel %vm644, %v639, %v643
      %v647 = vsel %vm644, %v641, %v637
      %v648 = vsel %vm644, %v643, %v639
      %v649 = vrot.slane %v520, 5
      %v650 = vrot.slane %v521, 5
      %v653 = vmul.f32 %v559, %v649
      %v654 = vmul.f32 %v560, %v650
      %v655 = vlaneseq
      %v656 = vshrl.u32 %v655, 7
      %v657 = vsub.s32 0, %v656
      %v658 = vrot.slane %v653, %v657
      %v659 = vlaneseq
      %v660 = vshrl.u32 %v659, 7
      %v661 = vsub.s32 0, %v660
      %v662 = vrot.slane %v654, %v661
      %v663 = vmul.f32 %v647, %v658
      %v664 = vmul.f32 %v645, %v662
      %v665 = vmul.f32 %v648, %v658
      %v666 = vmul.f32 %v646, %v662
      %667 = vset.pattern.permute.xlu0 2
      %668 = vperm.xlu0 %667, %v522
      %v669 = vpop.permute.xlu0 %668
      %671 = vset.pattern.permute.xlu0 2
      %672 = vperm.xlu0 %671, %v523
      %v673 = vpop.permute.xlu0 %672
      %v675 = vmul.f32 %v663, %v669
      %v676 = vmul.f32 %v664, %v669
      %v677 = vmul.f32 %v665, %v673
      %v678 = vmul.f32 %v666, %v673
      %v679 = vadd.f32 %v632, %v675
      %v680 = vadd.f32 %v633, %v676
      %v681 = vadd.f32 %v634, %v677
      %v682 = vadd.f32 %v635, %v678
      %683 = vrot.lane.b32.xlu0 %v516, 65
      %v684 = vpop.permute.xlu0 %683
      %685 = vrot.lane.b32.xlu0 %v518, 65
      %v686 = vpop.permute.xlu0 %685
      %687 = vrot.lane.b32.xlu0 %v517, 65
      %v688 = vpop.permute.xlu0 %687
      %689 = vrot.lane.b32.xlu0 %v519, 65
      %v690 = vpop.permute.xlu0 %689
      %vm691 = vcmp.lt.s32.totalorder %v547, 65
      %v692 = vsel %vm691, %v684, %v688
      %v693 = vsel %vm691, %v686, %v690
      %v694 = vsel %vm691, %v688, %v684
      %v695 = vsel %vm691, %v690, %v686
      %v696 = vmul.f32 %v520, %v561
      %v697 = vmul.f32 %v521, %v562
      %v698 = vlaneseq
      %v699 = vshrl.u32 %v698, 7
      %v700 = vsub.s32 0, %v699
      %v701 = vrot.slane %v696, %v700
      %v702 = vlaneseq
      %v703 = vshrl.u32 %v702, 7
      %v704 = vsub.s32 0, %v703
      %v705 = vrot.slane %v697, %v704
      %v706 = vmul.f32 %v694, %v701
      %v707 = vmul.f32 %v692, %v705
      %v708 = vmul.f32 %v695, %v701
      %v709 = vmul.f32 %v693, %v705
      %710 = vset.pattern.permute.xlu0 3
      %711 = vperm.xlu0 %710, %v522
      %v712 = vpop.permute.xlu0 %711
      %714 = vset.pattern.permute.xlu0 3
      %715 = vperm.xlu0 %714, %v523
      %v716 = vpop.permute.xlu0 %715
      %v718 = vmul.f32 %v706, %v712
      %v719 = vmul.f32 %v707, %v712
      %v720 = vmul.f32 %v708, %v716
      %v721 = vmul.f32 %v709, %v716
      %v722 = vadd.f32 %v679, %v718
      %v723 = vadd.f32 %v680, %v719
      %v724 = vadd.f32 %v681, %v720
      %v725 = vadd.f32 %v682, %v721
      %726 = vrot.lane.b32.xlu0 %v516, 64
      %v727 = vpop.permute.xlu0 %726
      %728 = vrot.lane.b32.xlu0 %v518, 64
      %v729 = vpop.permute.xlu0 %728
      %730 = vrot.lane.b32.xlu0 %v517, 64
      %v731 = vpop.permute.xlu0 %730
      %732 = vrot.lane.b32.xlu0 %v519, 64
      %v733 = vpop.permute.xlu0 %732
      %vm734 = vcmp.lt.s32.totalorder %v547, 64
      %v735 = vsel %vm734, %v727, %v731
      %v736 = vsel %vm734, %v729, %v733
      %v737 = vsel %vm734, %v731, %v727
      %v738 = vsel %vm734, %v733, %v729
      %v739 = vlaneseq
      %v740 = vshrl.u32 %v739, 7
      %v741 = vsub.s32 0, %v740
      %v742 = vrot.slane %v520, %v741
      %v743 = vlaneseq
      %v744 = vshrl.u32 %v743, 7
      %v745 = vsub.s32 0, %v744
      %v746 = vrot.slane %v521, %v745
      %v747 = vmul.f32 %v737, %v742
      %v748 = vmul.f32 %v735, %v746
      %v749 = vmul.f32 %v738, %v742
      %v750 = vmul.f32 %v736, %v746
      %751 = vset.pattern.permute.xlu0 4
      %752 = vperm.xlu0 %751, %v522
      %v753 = vpop.permute.xlu0 %752
      %755 = vset.pattern.permute.xlu0 4
      %756 = vperm.xlu0 %755, %v523
      %v757 = vpop.permute.xlu0 %756
      %v759 = vmul.f32 %v747, %v753
      %v760 = vmul.f32 %v748, %v753
      %v761 = vmul.f32 %v749, %v757
      %v762 = vmul.f32 %v750, %v757
      %v763 = vadd.f32 %v722, %v759
      %v764 = vadd.f32 %v723, %v760
      %v765 = vadd.f32 %v724, %v761
      %v766 = vadd.f32 %v725, %v762
      %767 = vrot.lane.b32.xlu0 %v516, 63
      %v768 = vpop.permute.xlu0 %767
      %769 = vrot.lane.b32.xlu0 %v518, 63
      %v770 = vpop.permute.xlu0 %769
      %771 = vrot.lane.b32.xlu0 %v517, 63
      %v772 = vpop.permute.xlu0 %771
      %773 = vrot.lane.b32.xlu0 %v519, 63
      %v774 = vpop.permute.xlu0 %773
      %vm775 = vcmp.lt.s32.totalorder %v547, 63
      %v776 = vsel %vm775, %v768, %v772
      %v777 = vsel %vm775, %v770, %v774
      %v778 = vsel %vm775, %v772, %v768
      %v779 = vsel %vm775, %v774, %v770
      %v780 = vmul.f32 %v520, %v649
      %v781 = vmul.f32 %v521, %v650
      %v782 = vlaneseq
      %v783 = vshrl.u32 %v782, 7
      %v784 = vsub.s32 0, %v783
      %v785 = vrot.slane %v780, %v784
      %v786 = vlaneseq
      %v787 = vshrl.u32 %v786, 7
      %v788 = vsub.s32 0, %v787
      %v789 = vrot.slane %v781, %v788
      %v790 = vmul.f32 %v778, %v785
      %v791 = vmul.f32 %v776, %v789
      %v792 = vmul.f32 %v779, %v785
      %v793 = vmul.f32 %v777, %v789
      %794 = vset.pattern.permute.xlu0 5
      %795 = vperm.xlu0 %794, %v522
      %v796 = vpop.permute.xlu0 %795
      %798 = vset.pattern.permute.xlu0 5
      %799 = vperm.xlu0 %798, %v523
      %v800 = vpop.permute.xlu0 %799
      %v802 = vmul.f32 %v790, %v796
      %v803 = vmul.f32 %v791, %v796
      %v804 = vmul.f32 %v792, %v800
      %v805 = vmul.f32 %v793, %v800
      %v806 = vadd.f32 %v763, %v802
      %v807 = vadd.f32 %v764, %v803
      %v808 = vadd.f32 %v765, %v804
      %v809 = vadd.f32 %v766, %v805
      %810 = vrot.lane.b32.xlu0 %v516, 57
      %v811 = vpop.permute.xlu0 %810
      %812 = vrot.lane.b32.xlu0 %v518, 57
      %v813 = vpop.permute.xlu0 %812
      %814 = vrot.lane.b32.xlu0 %v517, 57
      %v815 = vpop.permute.xlu0 %814
      %816 = vrot.lane.b32.xlu0 %v519, 57
      %v817 = vpop.permute.xlu0 %816
      %vm818 = vcmp.lt.s32.totalorder %v547, 57
      %v819 = vsel %vm818, %v811, %v815
      %v820 = vsel %vm818, %v813, %v817
      %v821 = vsel %vm818, %v815, %v811
      %v822 = vsel %vm818, %v817, %v813
      %v823 = vrot.slane %v520, 3
      %v824 = vrot.slane %v521, 3
      %v827 = vmul.f32 %v520, %v823
      %v828 = vmul.f32 %v521, %v824
      %v829 = vmul.f32 %v827, %v561
      %v830 = vmul.f32 %v828, %v562
      %v831 = vlaneseq
      %v832 = vshrl.u32 %v831, 7
      %v833 = vsub.s32 0, %v832
      %v834 = vrot.slane %v829, %v833
      %v835 = vlaneseq
      %v836 = vshrl.u32 %v835, 7
      %v837 = vsub.s32 0, %v836
      %v838 = vrot.slane %v830, %v837
      %v839 = vmul.f32 %v821, %v834
      %v840 = vmul.f32 %v819, %v838
      %v841 = vmul.f32 %v822, %v834
      %v842 = vmul.f32 %v820, %v838
      %843 = vset.pattern.permute.xlu0 6
      %844 = vperm.xlu0 %843, %v522
      %v845 = vpop.permute.xlu0 %844
      %847 = vset.pattern.permute.xlu0 6
      %848 = vperm.xlu0 %847, %v523
      %v849 = vpop.permute.xlu0 %848
      %v851 = vmul.f32 %v839, %v845
      %v852 = vmul.f32 %v840, %v845
      %v853 = vmul.f32 %v841, %v849
      %v854 = vmul.f32 %v842, %v849
      %v855 = vadd.f32 %v806, %v851
      %v856 = vadd.f32 %v807, %v852
      %v857 = vadd.f32 %v808, %v853
      %v858 = vadd.f32 %v809, %v854
      %859 = vrot.lane.b32.xlu0 %v516, 56
      %v860 = vpop.permute.xlu0 %859
      %861 = vrot.lane.b32.xlu0 %v518, 56
      %v862 = vpop.permute.xlu0 %861
      %863 = vrot.lane.b32.xlu0 %v517, 56
      %v864 = vpop.permute.xlu0 %863
      %865 = vrot.lane.b32.xlu0 %v519, 56
      %v866 = vpop.permute.xlu0 %865
      %vm867 = vcmp.lt.s32.totalorder %v547, 56
      %v868 = vsel %vm867, %v860, %v864
      %v869 = vsel %vm867, %v862, %v866
      %v870 = vsel %vm867, %v864, %v860
      %v871 = vsel %vm867, %v866, %v862
      %v872 = vlaneseq
      %v873 = vshrl.u32 %v872, 7
      %v874 = vsub.s32 0, %v873
      %v875 = vrot.slane %v827, %v874
      %v876 = vlaneseq
      %v877 = vshrl.u32 %v876, 7
      %v878 = vsub.s32 0, %v877
      %v879 = vrot.slane %v828, %v878
      %v880 = vmul.f32 %v870, %v875
      %v881 = vmul.f32 %v868, %v879
      %v882 = vmul.f32 %v871, %v875
      %v883 = vmul.f32 %v869, %v879
      %884 = vset.pattern.permute.xlu0 7
      %885 = vperm.xlu0 %884, %v522
      %v886 = vpop.permute.xlu0 %885
      %888 = vset.pattern.permute.xlu0 7
      %889 = vperm.xlu0 %888, %v523
      %v890 = vpop.permute.xlu0 %889
      %v892 = vmul.f32 %v880, %v886
      %v893 = vmul.f32 %v881, %v886
      %v894 = vmul.f32 %v882, %v890
      %v895 = vmul.f32 %v883, %v890
      %v896 = vadd.f32 %v855, %v892
      %v897 = vadd.f32 %v856, %v893
      %v898 = vadd.f32 %v857, %v894
      %v899 = vadd.f32 %v858, %v895
      %900 = vrot.lane.b32.xlu0 %v516, 55
      %v901 = vpop.permute.xlu0 %900
      %902 = vrot.lane.b32.xlu0 %v518, 55
      %v903 = vpop.permute.xlu0 %902
      %904 = vrot.lane.b32.xlu0 %v517, 55
      %v905 = vpop.permute.xlu0 %904
      %906 = vrot.lane.b32.xlu0 %v519, 55
      %v907 = vpop.permute.xlu0 %906
      %vm908 = vcmp.lt.s32.totalorder %v547, 55
      %v909 = vsel %vm908, %v901, %v905
      %v910 = vsel %vm908, %v903, %v907
      %v911 = vsel %vm908, %v905, %v901
      %v912 = vsel %vm908, %v907, %v903
      %v913 = vmul.f32 %v827, %v649
      %v914 = vmul.f32 %v828, %v650
      %v915 = vlaneseq
      %v916 = vshrl.u32 %v915, 7
      %v917 = vsub.s32 0, %v916
      %v918 = vrot.slane %v913, %v917
      %v919 = vlaneseq
      %v920 = vshrl.u32 %v919, 7
      %v921 = vsub.s32 0, %v920
      %v922 = vrot.slane %v914, %v921
      %v923 = vmul.f32 %v911, %v918
      %v924 = vmul.f32 %v909, %v922
      %v925 = vmul.f32 %v912, %v918
      %v926 = vmul.f32 %v910, %v922
      %927 = vset.pattern.permute.xlu0 8
      %928 = vperm.xlu0 %927, %v522
      %v929 = vpop.permute.xlu0 %928
      %931 = vset.pattern.permute.xlu0 8
      %932 = vperm.xlu0 %931, %v523
      %v933 = vpop.permute.xlu0 %932
      %v935 = vmul.f32 %v923, %v929
      %v936 = vmul.f32 %v924, %v929
      %v937 = vmul.f32 %v925, %v933
      %v938 = vmul.f32 %v926, %v933
      %v939 = vadd.f32 %v896, %v935
      %v940 = vadd.f32 %v897, %v936
      %v941 = vadd.f32 %v898, %v937
      %v942 = vadd.f32 %v899, %v938
      %943 = vrot.lane.b32.xlu0 %v516, 9
      %v944 = vpop.permute.xlu0 %943
      %945 = vrot.lane.b32.xlu0 %v518, 9
      %v946 = vpop.permute.xlu0 %945
      %947 = vrot.lane.b32.xlu0 %v517, 9
      %v948 = vpop.permute.xlu0 %947
      %949 = vrot.lane.b32.xlu0 %v519, 9
      %v950 = vpop.permute.xlu0 %949
      %vm951 = vcmp.lt.s32.totalorder %v547, 9
      %v952 = vsel %vm951, %v944, %v948
      %v953 = vsel %vm951, %v946, %v950
      %v954 = vsel %vm951, %v948, %v944
      %v955 = vsel %vm951, %v950, %v946
      %v956 = vlaneseq
      %v957 = vshrl.u32 %v956, 7
      %v958 = vsub.s32 2, %v957
      %v959 = vrot.slane %v559, %v958
      %v960 = vlaneseq
      %v961 = vshrl.u32 %v960, 7
      %v962 = vsub.s32 2, %v961
      %v963 = vrot.slane %v560, %v962
      %v964 = vmul.f32 %v954, %v959
      %v965 = vmul.f32 %v952, %v963
      %v966 = vmul.f32 %v955, %v959
      %v967 = vmul.f32 %v953, %v963
      %968 = vset.pattern.permute.xlu0 9
      %969 = vperm.xlu0 %968, %v522
      %v970 = vpop.permute.xlu0 %969
      %972 = vset.pattern.permute.xlu0 9
      %973 = vperm.xlu0 %972, %v523
      %v974 = vpop.permute.xlu0 %973
      %v976 = vmul.f32 %v964, %v970
      %v977 = vmul.f32 %v965, %v970
      %v978 = vmul.f32 %v966, %v974
      %v979 = vmul.f32 %v967, %v974
      %v980 = vadd.f32 %v939, %v976
      %v981 = vadd.f32 %v940, %v977
      %v982 = vadd.f32 %v941, %v978
      %v983 = vadd.f32 %v942, %v979
      %984 = vrot.lane.b32.xlu0 %v516, 8
      %v985 = vpop.permute.xlu0 %984
      %986 = vrot.lane.b32.xlu0 %v518, 8
      %v987 = vpop.permute.xlu0 %986
      %988 = vrot.lane.b32.xlu0 %v517, 8
      %v989 = vpop.permute.xlu0 %988
      %990 = vrot.lane.b32.xlu0 %v519, 8
      %v991 = vpop.permute.xlu0 %990
      %vm992 = vcmp.lt.s32.totalorder %v547, 8
      %v993 = vsel %vm992, %v985, %v989
      %v994 = vsel %vm992, %v987, %v991
      %v995 = vsel %vm992, %v989, %v985
      %v996 = vsel %vm992, %v991, %v987
      %v997 = vlaneseq
      %v998 = vshrl.u32 %v997, 7
      %v999 = vsub.s32 2, %v998
      %v1000 = vrot.slane %v520, %v999
      %v1001 = vlaneseq
      %v1002 = vshrl.u32 %v1001, 7
      %v1003 = vsub.s32 2, %v1002
      %v1004 = vrot.slane %v521, %v1003
      %v1005 = vmul.f32 %v995, %v1000
      %v1006 = vmul.f32 %v993, %v1004
      %v1007 = vmul.f32 %v996, %v1000
      %v1008 = vmul.f32 %v994, %v1004
      %1009 = vset.pattern.permute.xlu0 10
      %1010 = vperm.xlu0 %1009, %v522
      %v1011 = vpop.permute.xlu0 %1010
      %1013 = vset.pattern.permute.xlu0 10
      %1014 = vperm.xlu0 %1013, %v523
      %v1015 = vpop.permute.xlu0 %1014
      %v1017 = vmul.f32 %v1005, %v1011
      %v1018 = vmul.f32 %v1006, %v1011
      %v1019 = vmul.f32 %v1007, %v1015
      %v1020 = vmul.f32 %v1008, %v1015
      %v1021 = vadd.f32 %v980, %v1017
      %v1022 = vadd.f32 %v981, %v1018
      %v1023 = vadd.f32 %v982, %v1019
      %v1024 = vadd.f32 %v983, %v1020
      %1025 = vrot.lane.b32.xlu0 %v516, 7
      %v1026 = vpop.permute.xlu0 %1025
      %1027 = vrot.lane.b32.xlu0 %v518, 7
      %v1028 = vpop.permute.xlu0 %1027
      %1029 = vrot.lane.b32.xlu0 %v517, 7
      %v1030 = vpop.permute.xlu0 %1029
      %1031 = vrot.lane.b32.xlu0 %v519, 7
      %v1032 = vpop.permute.xlu0 %1031
      %vm1033 = vcmp.lt.s32.totalorder %v547, 7
      %v1034 = vsel %vm1033, %v1026, %v1030
      %v1035 = vsel %vm1033, %v1028, %v1032
      %v1036 = vsel %vm1033, %v1030, %v1026
      %v1037 = vsel %vm1033, %v1032, %v1028
      %v1038 = vlaneseq
      %v1039 = vshrl.u32 %v1038, 7
      %v1040 = vsub.s32 2, %v1039
      %v1041 = vrot.slane %v827, %v1040
      %v1042 = vlaneseq
      %v1043 = vshrl.u32 %v1042, 7
      %v1044 = vsub.s32 2, %v1043
      %v1045 = vrot.slane %v828, %v1044
      %v1046 = vmul.f32 %v1036, %v1041
      %v1047 = vmul.f32 %v1034, %v1045
      %v1048 = vmul.f32 %v1037, %v1041
      %v1049 = vmul.f32 %v1035, %v1045
      %1050 = vset.pattern.permute.xlu0 11
      %1051 = vperm.xlu0 %1050, %v522
      %v1052 = vpop.permute.xlu0 %1051
      %1054 = vset.pattern.permute.xlu0 11
      %1055 = vperm.xlu0 %1054, %v523
      %v1056 = vpop.permute.xlu0 %1055
      %v1058 = vmul.f32 %v1046, %v1052
      %v1059 = vmul.f32 %v1047, %v1052
      %v1060 = vmul.f32 %v1048, %v1056
      %v1061 = vmul.f32 %v1049, %v1056
      %v1062 = vadd.f32 %v1021, %v1058
      %v1063 = vadd.f32 %v1022, %v1059
      %v1064 = vadd.f32 %v1023, %v1060
      %v1065 = vadd.f32 %v1024, %v1061
      %1066 = vrot.lane.b32.xlu0 %v516, 1
      %v1067 = vpop.permute.xlu0 %1066
      %1068 = vrot.lane.b32.xlu0 %v518, 1
      %v1069 = vpop.permute.xlu0 %1068
      %1070 = vrot.lane.b32.xlu0 %v517, 1
      %v1071 = vpop.permute.xlu0 %1070
      %1072 = vrot.lane.b32.xlu0 %v519, 1
      %v1073 = vpop.permute.xlu0 %1072
      %vm1074 = vcmp.lt.s32.totalorder %v547, 1
      %v1075 = vsel %vm1074, %v1067, %v1071
      %v1076 = vsel %vm1074, %v1069, %v1073
      %v1077 = vsel %vm1074, %v1071, %v1067
      %v1078 = vsel %vm1074, %v1073, %v1069
      %v1079 = vlaneseq
      %v1080 = vshrl.u32 %v1079, 7
      %v1081 = vsub.s32 4, %v1080
      %v1082 = vrot.slane %v520, %v1081
      %v1083 = vlaneseq
      %v1084 = vshrl.u32 %v1083, 7
      %v1085 = vsub.s32 4, %v1084
      %v1086 = vrot.slane %v521, %v1085
      %v1087 = vmul.f32 %v1077, %v1082
      %v1088 = vmul.f32 %v1075, %v1086
      %v1089 = vmul.f32 %v1078, %v1082
      %v1090 = vmul.f32 %v1076, %v1086
      %1091 = vset.pattern.permute.xlu0 12
      %1092 = vperm.xlu0 %1091, %v522
      %v1093 = vpop.permute.xlu0 %1092
      %1095 = vset.pattern.permute.xlu0 12
      %1096 = vperm.xlu0 %1095, %v523
      %v1097 = vpop.permute.xlu0 %1096
      %v1099 = vmul.f32 %v1087, %v1093
      %v1100 = vmul.f32 %v1088, %v1093
      %v1101 = vmul.f32 %v1089, %v1097
      %v1102 = vmul.f32 %v1090, %v1097
      %v1103 = vadd.f32 %v1062, %v1099
      %v1104 = vadd.f32 %v1063, %v1100
      %v1105 = vadd.f32 %v1064, %v1101
      %v1106 = vadd.f32 %v1065, %v1102
      %1107 = vrot.lane.b32.xlu0 %v516, 127
      %v1108 = vpop.permute.xlu0 %1107
      %1109 = vrot.lane.b32.xlu0 %v518, 127
      %v1110 = vpop.permute.xlu0 %1109
      %1111 = vrot.lane.b32.xlu0 %v517, 127
      %v1112 = vpop.permute.xlu0 %1111
      %1113 = vrot.lane.b32.xlu0 %v519, 127
      %v1114 = vpop.permute.xlu0 %1113
      %vm1115 = vcmp.lt.s32.totalorder %v547, 127
      %v1116 = vsel %vm1115, %v1108, %v1112
      %v1117 = vsel %vm1115, %v1110, %v1114
      %v1118 = vsel %vm1115, %v1112, %v1108
      %v1119 = vsel %vm1115, %v1114, %v1110
      %v1120 = vlaneseq
      %v1121 = vshrl.u32 %v1120, 7
      %v1122 = vsub.s32 5, %v1121
      %v1123 = vrot.slane %v520, %v1122
      %v1124 = vlaneseq
      %v1125 = vshrl.u32 %v1124, 7
      %v1126 = vsub.s32 5, %v1125
      %v1127 = vrot.slane %v521, %v1126
      %v1128 = vmul.f32 %v1116, %v1123
      %v1129 = vmul.f32 %v1118, %v1127
      %v1130 = vmul.f32 %v1117, %v1123
      %v1131 = vmul.f32 %v1119, %v1127
      %1132 = vset.pattern.permute.xlu0 14
      %1133 = vperm.xlu0 %1132, %v522
      %v1134 = vpop.permute.xlu0 %1133
      %1136 = vset.pattern.permute.xlu0 14
      %1137 = vperm.xlu0 %1136, %v523
      %v1138 = vpop.permute.xlu0 %1137
      %v1140 = vmul.f32 %v1128, %v1134
      %v1141 = vmul.f32 %v1129, %v1134
      %v1142 = vmul.f32 %v1130, %v1138
      %v1143 = vmul.f32 %v1131, %v1138
      %v1144 = vadd.f32 %v1103, %v1140
      %v1145 = vadd.f32 %v1104, %v1141
      %v1146 = vadd.f32 %v1105, %v1142
      %v1147 = vadd.f32 %v1106, %v1143
      %1148 = vrot.lane.b32.xlu0 %v516, 121
      %v1149 = vpop.permute.xlu0 %1148
      %1150 = vrot.lane.b32.xlu0 %v518, 121
      %v1151 = vpop.permute.xlu0 %1150
      %1152 = vrot.lane.b32.xlu0 %v517, 121
      %v1153 = vpop.permute.xlu0 %1152
      %1154 = vrot.lane.b32.xlu0 %v519, 121
      %v1155 = vpop.permute.xlu0 %1154
      %vm1156 = vcmp.lt.s32.totalorder %v547, 121
      %v1157 = vsel %vm1156, %v1149, %v1153
      %v1158 = vsel %vm1156, %v1151, %v1155
      %v1159 = vsel %vm1156, %v1153, %v1149
      %v1160 = vsel %vm1156, %v1155, %v1151
      %v1161 = vrot.slane %v520, 1
      %v1162 = vrot.slane %v521, 1
      %v1165 = vmul.f32 %v520, %v1161
      %v1166 = vmul.f32 %v521, %v1162
      %v1167 = vlaneseq
      %v1168 = vshrl.u32 %v1167, 7
      %v1169 = vsub.s32 3, %v1168
      %v1170 = vrot.slane %v1165, %v1169
      %v1171 = vlaneseq
      %v1172 = vshrl.u32 %v1171, 7
      %v1173 = vsub.s32 3, %v1172
      %v1174 = vrot.slane %v1166, %v1173
      %v1175 = vmul.f32 %v1157, %v1170
      %v1176 = vmul.f32 %v1159, %v1174
      %v1177 = vmul.f32 %v1158, %v1170
      %v1178 = vmul.f32 %v1160, %v1174
      %1179 = vset.pattern.permute.xlu0 15
      %1180 = vperm.xlu0 %1179, %v522
      %v1181 = vpop.permute.xlu0 %1180
      %1183 = vset.pattern.permute.xlu0 15
      %1184 = vperm.xlu0 %1183, %v523
      %v1185 = vpop.permute.xlu0 %1184
      %v1187 = vmul.f32 %v1175, %v1181
      %v1188 = vmul.f32 %v1176, %v1181
      %v1189 = vmul.f32 %v1177, %v1185
      %v1190 = vmul.f32 %v1178, %v1185
      %v1191 = vadd.f32 %v1144, %v1187
      %v1192 = vadd.f32 %v1145, %v1188
      %v1193 = vadd.f32 %v1146, %v1189
      %v1194 = vadd.f32 %v1147, %v1190
      %1195 = vrot.lane.b32.xlu0 %v516, 120
      %v1196 = vpop.permute.xlu0 %1195
      %1197 = vrot.lane.b32.xlu0 %v518, 120
      %v1198 = vpop.permute.xlu0 %1197
      %1199 = vrot.lane.b32.xlu0 %v517, 120
      %v1200 = vpop.permute.xlu0 %1199
      %1201 = vrot.lane.b32.xlu0 %v519, 120
      %v1202 = vpop.permute.xlu0 %1201
      %vm1203 = vcmp.lt.s32.totalorder %v547, 120
      %v1204 = vsel %vm1203, %v1196, %v1200
      %v1205 = vsel %vm1203, %v1198, %v1202
      %v1206 = vsel %vm1203, %v1200, %v1196
      %v1207 = vsel %vm1203, %v1202, %v1198
      %v1208 = vlaneseq
      %v1209 = vshrl.u32 %v1208, 7
      %v1210 = vsub.s32 3, %v1209
      %v1211 = vrot.slane %v520, %v1210
      %v1212 = vlaneseq
      %v1213 = vshrl.u32 %v1212, 7
      %v1214 = vsub.s32 3, %v1213
      %v1215 = vrot.slane %v521, %v1214
      %v1216 = vmul.f32 %v1204, %v1211
      %v1217 = vmul.f32 %v1206, %v1215
      %v1218 = vmul.f32 %v1205, %v1211
      %v1219 = vmul.f32 %v1207, %v1215
      %1220 = vset.pattern.permute.xlu0 16
      %1221 = vperm.xlu0 %1220, %v522
      %v1222 = vpop.permute.xlu0 %1221
      %1224 = vset.pattern.permute.xlu0 16
      %1225 = vperm.xlu0 %1224, %v523
      %v1226 = vpop.permute.xlu0 %1225
      %v1228 = vmul.f32 %v1216, %v1222
      %v1229 = vmul.f32 %v1217, %v1222
      %v1230 = vmul.f32 %v1218, %v1226
      %v1231 = vmul.f32 %v1219, %v1226
      %v1232 = vadd.f32 %v1191, %v1228
      %v1233 = vadd.f32 %v1192, %v1229
      %v1234 = vadd.f32 %v1193, %v1230
      %v1235 = vadd.f32 %v1194, %v1231
      %1236 = vrot.lane.b32.xlu0 %v516, 119
      %v1237 = vpop.permute.xlu0 %1236
      %1238 = vrot.lane.b32.xlu0 %v518, 119
      %v1239 = vpop.permute.xlu0 %1238
      %1240 = vrot.lane.b32.xlu0 %v517, 119
      %v1241 = vpop.permute.xlu0 %1240
      %1242 = vrot.lane.b32.xlu0 %v519, 119
      %v1243 = vpop.permute.xlu0 %1242
      %vm1244 = vcmp.lt.s32.totalorder %v547, 119
      %v1245 = vsel %vm1244, %v1237, %v1241
      %v1246 = vsel %vm1244, %v1239, %v1243
      %v1247 = vsel %vm1244, %v1241, %v1237
      %v1248 = vsel %vm1244, %v1243, %v1239
      %v1249 = vlaneseq
      %v1250 = vshrl.u32 %v1249, 7
      %v1251 = vsub.s32 3, %v1250
      %v1252 = vrot.slane %v559, %v1251
      %v1253 = vlaneseq
      %v1254 = vshrl.u32 %v1253, 7
      %v1255 = vsub.s32 3, %v1254
      %v1256 = vrot.slane %v560, %v1255
      %v1257 = vmul.f32 %v1245, %v1252
      %v1258 = vmul.f32 %v1247, %v1256
      %v1259 = vmul.f32 %v1246, %v1252
      %v1260 = vmul.f32 %v1248, %v1256
      %1261 = vset.pattern.permute.xlu0 17
      %1262 = vperm.xlu0 %1261, %v522
      %v1263 = vpop.permute.xlu0 %1262
      %1265 = vset.pattern.permute.xlu0 17
      %1266 = vperm.xlu0 %1265, %v523
      %v1267 = vpop.permute.xlu0 %1266
      %v1269 = vmul.f32 %v1257, %v1263
      %v1270 = vmul.f32 %v1258, %v1263
      %v1271 = vmul.f32 %v1259, %v1267
      %v1272 = vmul.f32 %v1260, %v1267
      %v1273 = vadd.f32 %v1232, %v1269
      %v1274 = vadd.f32 %v1233, %v1270
      %v1275 = vadd.f32 %v1234, %v1271
      %v1276 = vadd.f32 %v1235, %v1272
      %v1277 = vmul.f32 %v1165, %v823
      %v1278 = vmul.f32 %v1166, %v824
      %v1279 = vlaneseq
      %v1280 = vshrl.u32 %v1279, 7
      %v1281 = vsub.s32 1, %v1280
      %v1282 = vrot.slane %v1277, %v1281
      %v1283 = vlaneseq
      %v1284 = vshrl.u32 %v1283, 7
      %v1285 = vsub.s32 1, %v1284
      %v1286 = vrot.slane %v1278, %v1285
      %v1287 = vmul.f32 %v549, %v1282
      %v1288 = vmul.f32 %v551, %v1286
      %v1289 = vmul.f32 %v550, %v1282
      %v1290 = vmul.f32 %v552, %v1286
      %1291 = vset.pattern.permute.xlu0 18
      %1292 = vperm.xlu0 %1291, %v522
      %v1293 = vpop.permute.xlu0 %1292
      %1295 = vset.pattern.permute.xlu0 18
      %1296 = vperm.xlu0 %1295, %v523
      %v1297 = vpop.permute.xlu0 %1296
      %v1299 = vmul.f32 %v1287, %v1293
      %v1300 = vmul.f32 %v1288, %v1293
      %v1301 = vmul.f32 %v1289, %v1297
      %v1302 = vmul.f32 %v1290, %v1297
      %v1303 = vadd.f32 %v1273, %v1299
      %v1304 = vadd.f32 %v1274, %v1300
      %v1305 = vadd.f32 %v1275, %v1301
      %v1306 = vadd.f32 %v1276, %v1302
      %v1307 = vlaneseq
      %v1308 = vshrl.u32 %v1307, 7
      %v1309 = vsub.s32 1, %v1308
      %v1310 = vrot.slane %v1165, %v1309
      %v1311 = vlaneseq
      %v1312 = vshrl.u32 %v1311, 7
      %v1313 = vsub.s32 1, %v1312
      %v1314 = vrot.slane %v1166, %v1313
      %v1315 = vmul.f32 %v604, %v1310
      %v1316 = vmul.f32 %v606, %v1314
      %v1317 = vmul.f32 %v605, %v1310
      %v1318 = vmul.f32 %v607, %v1314
      %1319 = vset.pattern.permute.xlu0 19
      %1320 = vperm.xlu0 %1319, %v522
      %v1321 = vpop.permute.xlu0 %1320
      %1323 = vset.pattern.permute.xlu0 19
      %1324 = vperm.xlu0 %1323, %v523
      %v1325 = vpop.permute.xlu0 %1324
      %v1327 = vmul.f32 %v1315, %v1321
      %v1328 = vmul.f32 %v1316, %v1321
      %v1329 = vmul.f32 %v1317, %v1325
      %v1330 = vmul.f32 %v1318, %v1325
      %v1331 = vadd.f32 %v1303, %v1327
      %v1332 = vadd.f32 %v1304, %v1328
      %v1333 = vadd.f32 %v1305, %v1329
      %v1334 = vadd.f32 %v1306, %v1330
      %v1335 = vmul.f32 %v1165, %v561
      %v1336 = vmul.f32 %v1166, %v562
      %v1337 = vlaneseq
      %v1338 = vshrl.u32 %v1337, 7
      %v1339 = vsub.s32 1, %v1338
      %v1340 = vrot.slane %v1335, %v1339
      %v1341 = vlaneseq
      %v1342 = vshrl.u32 %v1341, 7
      %v1343 = vsub.s32 1, %v1342
      %v1344 = vrot.slane %v1336, %v1343
      %v1345 = vmul.f32 %v645, %v1340
      %v1346 = vmul.f32 %v647, %v1344
      %v1347 = vmul.f32 %v646, %v1340
      %v1348 = vmul.f32 %v648, %v1344
      %1349 = vset.pattern.permute.xlu0 20
      %1350 = vperm.xlu0 %1349, %v522
      %v1351 = vpop.permute.xlu0 %1350
      %1353 = vset.pattern.permute.xlu0 20
      %1354 = vperm.xlu0 %1353, %v523
      %v1355 = vpop.permute.xlu0 %1354
      %v1357 = vmul.f32 %v1345, %v1351
      %v1358 = vmul.f32 %v1346, %v1351
      %v1359 = vmul.f32 %v1347, %v1355
      %v1360 = vmul.f32 %v1348, %v1355
      %v1361 = vadd.f32 %v1331, %v1357
      %v1362 = vadd.f32 %v1332, %v1358
      %v1363 = vadd.f32 %v1333, %v1359
      %v1364 = vadd.f32 %v1334, %v1360
      %v1365 = vlaneseq
      %v1366 = vshrl.u32 %v1365, 7
      %v1367 = vsub.s32 1, %v1366
      %v1368 = vrot.slane %v827, %v1367
      %v1369 = vlaneseq
      %v1370 = vshrl.u32 %v1369, 7
      %v1371 = vsub.s32 1, %v1370
      %v1372 = vrot.slane %v828, %v1371
      %v1373 = vmul.f32 %v692, %v1368
      %v1374 = vmul.f32 %v694, %v1372
      %v1375 = vmul.f32 %v693, %v1368
      %v1376 = vmul.f32 %v695, %v1372
      %1377 = vset.pattern.permute.xlu0 21
      %1378 = vperm.xlu0 %1377, %v522
      %v1379 = vpop.permute.xlu0 %1378
      %1381 = vset.pattern.permute.xlu0 21
      %1382 = vperm.xlu0 %1381, %v523
      %v1383 = vpop.permute.xlu0 %1382
      %v1385 = vmul.f32 %v1373, %v1379
      %v1386 = vmul.f32 %v1374, %v1379
      %v1387 = vmul.f32 %v1375, %v1383
      %v1388 = vmul.f32 %v1376, %v1383
      %v1389 = vadd.f32 %v1361, %v1385
      %v1390 = vadd.f32 %v1362, %v1386
      %v1391 = vadd.f32 %v1363, %v1387
      %v1392 = vadd.f32 %v1364, %v1388
      %v1393 = vlaneseq
      %v1394 = vshrl.u32 %v1393, 7
      %v1395 = vsub.s32 1, %v1394
      %v1396 = vrot.slane %v520, %v1395
      %v1397 = vlaneseq
      %v1398 = vshrl.u32 %v1397, 7
      %v1399 = vsub.s32 1, %v1398
      %v1400 = vrot.slane %v521, %v1399
      %v1401 = vmul.f32 %v735, %v1396
      %v1402 = vmul.f32 %v737, %v1400
      %v1403 = vmul.f32 %v736, %v1396
      %v1404 = vmul.f32 %v738, %v1400
      %1405 = vset.pattern.permute.xlu0 22
      %1406 = vperm.xlu0 %1405, %v522
      %v1407 = vpop.permute.xlu0 %1406
      %1409 = vset.pattern.permute.xlu0 22
      %1410 = vperm.xlu0 %1409, %v523
      %v1411 = vpop.permute.xlu0 %1410
      %v1413 = vmul.f32 %v1401, %v1407
      %v1414 = vmul.f32 %v1402, %v1407
      %v1415 = vmul.f32 %v1403, %v1411
      %v1416 = vmul.f32 %v1404, %v1411
      %v1417 = vadd.f32 %v1389, %v1413
      %v1418 = vadd.f32 %v1390, %v1414
      %v1419 = vadd.f32 %v1391, %v1415
      %v1420 = vadd.f32 %v1392, %v1416
      %v1421 = vlaneseq
      %v1422 = vshrl.u32 %v1421, 7
      %v1423 = vsub.s32 1, %v1422
      %v1424 = vrot.slane %v696, %v1423
      %v1425 = vlaneseq
      %v1426 = vshrl.u32 %v1425, 7
      %v1427 = vsub.s32 1, %v1426
      %v1428 = vrot.slane %v697, %v1427
      %v1429 = vmul.f32 %v776, %v1424
      %v1430 = vmul.f32 %v778, %v1428
      %v1431 = vmul.f32 %v777, %v1424
      %v1432 = vmul.f32 %v779, %v1428
      %1433 = vset.pattern.permute.xlu0 23
      %1434 = vperm.xlu0 %1433, %v522
      %v1435 = vpop.permute.xlu0 %1434
      %1437 = vset.pattern.permute.xlu0 23
      %1438 = vperm.xlu0 %1437, %v523
      %v1439 = vpop.permute.xlu0 %1438
      %v1441 = vmul.f32 %v1429, %v1435
      %v1442 = vmul.f32 %v1430, %v1435
      %v1443 = vmul.f32 %v1431, %v1439
      %v1444 = vmul.f32 %v1432, %v1439
      %v1445 = vadd.f32 %v1417, %v1441
      %v1446 = vadd.f32 %v1418, %v1442
      %v1447 = vadd.f32 %v1419, %v1443
      %v1448 = vadd.f32 %v1420, %v1444
      %v1449 = vmul.f32 %v559, %v823
      %v1450 = vmul.f32 %v560, %v824
      %v1451 = vlaneseq
      %v1452 = vshrl.u32 %v1451, 7
      %v1453 = vsub.s32 1, %v1452
      %v1454 = vrot.slane %v1449, %v1453
      %v1455 = vlaneseq
      %v1456 = vshrl.u32 %v1455, 7
      %v1457 = vsub.s32 1, %v1456
      %v1458 = vrot.slane %v1450, %v1457
      %v1459 = vmul.f32 %v819, %v1454
      %v1460 = vmul.f32 %v821, %v1458
      %v1461 = vmul.f32 %v820, %v1454
      %v1462 = vmul.f32 %v822, %v1458
      %1463 = vset.pattern.permute.xlu0 24
      %1464 = vperm.xlu0 %1463, %v522
      %v1465 = vpop.permute.xlu0 %1464
      %1467 = vset.pattern.permute.xlu0 24
      %1468 = vperm.xlu0 %1467, %v523
      %v1469 = vpop.permute.xlu0 %1468
      %v1471 = vmul.f32 %v1459, %v1465
      %v1472 = vmul.f32 %v1460, %v1465
      %v1473 = vmul.f32 %v1461, %v1469
      %v1474 = vmul.f32 %v1462, %v1469
      %v1475 = vadd.f32 %v1445, %v1471
      %v1476 = vadd.f32 %v1446, %v1472
      %v1477 = vadd.f32 %v1447, %v1473
      %v1478 = vadd.f32 %v1448, %v1474
      %v1479 = vlaneseq
      %v1480 = vshrl.u32 %v1479, 7
      %v1481 = vsub.s32 1, %v1480
      %v1482 = vrot.slane %v559, %v1481
      %v1483 = vlaneseq
      %v1484 = vshrl.u32 %v1483, 7
      %v1485 = vsub.s32 1, %v1484
      %v1486 = vrot.slane %v560, %v1485
      %v1487 = vmul.f32 %v868, %v1482
      %v1488 = vmul.f32 %v870, %v1486
      %v1489 = vmul.f32 %v869, %v1482
      %v1490 = vmul.f32 %v871, %v1486
      %1491 = vset.pattern.permute.xlu0 25
      %1492 = vperm.xlu0 %1491, %v522
      %v1493 = vpop.permute.xlu0 %1492
      %1495 = vset.pattern.permute.xlu0 25
      %1496 = vperm.xlu0 %1495, %v523
      %v1497 = vpop.permute.xlu0 %1496
      %v1499 = vmul.f32 %v1487, %v1493
      %v1500 = vmul.f32 %v1488, %v1493
      %v1501 = vmul.f32 %v1489, %v1497
      %v1502 = vmul.f32 %v1490, %v1497
      %v1503 = vadd.f32 %v1475, %v1499
      %v1504 = vadd.f32 %v1476, %v1500
      %v1505 = vadd.f32 %v1477, %v1501
      %v1506 = vadd.f32 %v1478, %v1502
      %v1507 = vlaneseq
      %v1508 = vshrl.u32 %v1507, 7
      %v1509 = vsub.s32 1, %v1508
      %v1510 = vrot.slane %v565, %v1509
      %v1511 = vlaneseq
      %v1512 = vshrl.u32 %v1511, 7
      %v1513 = vsub.s32 1, %v1512
      %v1514 = vrot.slane %v566, %v1513
      %v1515 = vmul.f32 %v909, %v1510
      %v1516 = vmul.f32 %v911, %v1514
      %v1517 = vmul.f32 %v910, %v1510
      %v1518 = vmul.f32 %v912, %v1514
      %1519 = vset.pattern.permute.xlu0 26
      %1520 = vperm.xlu0 %1519, %v522
      %v1521 = vpop.permute.xlu0 %1520
      %1523 = vset.pattern.permute.xlu0 26
      %1524 = vperm.xlu0 %1523, %v523
      %v1525 = vpop.permute.xlu0 %1524
      %v1527 = vmul.f32 %v1515, %v1521
      %v1528 = vmul.f32 %v1516, %v1521
      %v1529 = vmul.f32 %v1517, %v1525
      %v1530 = vmul.f32 %v1518, %v1525
      %v1531 = vadd.f32 %v1503, %v1527
      %v1532 = vadd.f32 %v1504, %v1528
      %v1533 = vadd.f32 %v1505, %v1529
      %v1534 = vadd.f32 %v1506, %v1530
      %v1535 = vld [vmem:[%s5] sm:$0xff]
      %v1536 = vld [vmem:[%s5 + $0x8] sm:$0xff]
      %1538 = vset.pattern.permute.xlu0 0
      %1539 = vperm.xlu0 %1538, %v1535
      %v1540 = vpop.permute.xlu0 %1539
      %1543 = vset.pattern.permute.xlu0 0
      %1544 = vperm.xlu0 %1543, %v1536
      %v1545 = vpop.permute.xlu0 %1544
      %v1547 = vadd.f32 %v1531, %v1540
      %v1548 = vadd.f32 %v1532, %v1540
      %v1549 = vadd.f32 %v1533, %v1545
      %v1550 = vadd.f32 %v1534, %v1545
      %v1551 = vadd.f32 %v1547, %v1548
      %1552 = vadd.xlane.f32.xlu0 %v1551
      %v1553 = vpop.xlane.xlu0 %1552
      %v1554 = vadd.f32 %v1549, %v1550
      %1555 = vadd.xlane.f32.xlu0 %v1554
      %v1556 = vpop.xlane.xlu0 %1555
      %v1557 = vmul.f32 %v1553, 0.00390625
      %v1558 = vmul.f32 %v1556, 0.00390625
      %v1559 = vld [vmem:[%s6] sm:$0xff]
      %v1560 = vld [vmem:[%s6 + $0x8] sm:$0xff]
      %v1561 = vmul.f32 %v1559, %v1557
      %v1562 = vmul.f32 %v1560, %v1558
      %vm1563 = vcmask 64512
      %v1564 = vsel %vm1563, %v1561, 0.0
      %v1565 = vsel %vm1563, %v1562, 0.0
      %v1566 = vadd.f32 %v1564, %v1565
      %v1567 = vrot.slane %v1566, 4
      %v1568 = vadd.f32 %v1566, %v1567
      %v1569 = vrot.slane %v1568, 2
      %v1570 = vadd.f32 %v1568, %v1569
      %v1571 = vrot.slane %v1570, 1
      %v1572 = vadd.f32 %v1570, %v1571
      %v1573 = vld [vmem:[%s7] sm:$0x1]
      %v1574 = vadd.f32 %v1572, %v1573
      %v1575 = vmax.f32 %v1574, 0.0
      %v1576 = vld [vmem:[%s8] sm:$0xff]
      %v1577 = vld [vmem:[%s8 + $0x8] sm:$0xff]
      %v1578 = vlaneseq
      %v1579 = vshrl.u32 %v1578, 7
      %v1580 = vsub.s32 0, %v1579
      %v1581 = vrot.slane %v1575, %v1580
      %v1582 = vmul.f32 %v1576, %v1581
      %v1583 = vmul.f32 %v1577, %v1581
      %v1584 = vsel %vm1563, %v1582, 0.0
      %1585 = vadd.xlane.f32.xlu0 %v1584
      %v1586 = vpop.xlane.xlu0 %1585
      %v1587 = vsel %vm1563, %v1583, 0.0
      %1588 = vadd.xlane.f32.xlu0 %v1587
      %v1589 = vpop.xlane.xlu0 %1588
      %v1590 = vld [vmem:[%s9] sm:$0xff]
      %v1591 = vld [vmem:[%s9 + $0x8] sm:$0xff]
      %v1592 = vadd.f32 %v1586, %v1590
      %v1593 = vadd.f32 %v1589, %v1591
      %v1594 = vxor.u32 %v1592, 2147483648
      %v1595 = vxor.u32 %v1593, 2147483648
      %v1596 = vmul.f32 %v1594, 1.442695
      %v1597 = vpow.pop %v1596
      %v1598 = vmul.f32 %v1595, 1.442695
      %v1599 = vpow.pop %v1598
      %v1600 = vadd.f32 %v1597, 1.0
      %v1601 = vadd.f32 %v1599, 1.0
      %v1602 = vrcp.pop %v1600
      %v1603 = vmul.f32 1.0, %v1602
      %v1604 = vrcp.pop %v1601
      %v1605 = vmul.f32 1.0, %v1604
      %1607 = vset.pattern.permute.xlu0 0
      %1608 = vperm.xlu0 %1607, %v1603
      %v1609 = vpop.permute.xlu0 %1608
      %1612 = vset.pattern.permute.xlu0 0
      %1613 = vperm.xlu0 %1612, %v1605
      %v1614 = vpop.permute.xlu0 %1613
      %v1616 = vmul.f32 %v1547, %v1609
      %v1617 = vmul.f32 %v1548, %v1609
      %v1618 = vmul.f32 %v1549, %v1614
      %v1619 = vmul.f32 %v1550, %v1614
      %v1620 = vxor.u32 %v1616, 2147483648
      %v1621 = vxor.u32 %v1617, 2147483648
      %v1622 = vxor.u32 %v1618, 2147483648
      %v1623 = vxor.u32 %v1619, 2147483648
      %v1624 = vmul.f32 %v1620, 1.442695
      %v1625 = vpow.pop %v1624
      %v1626 = vmul.f32 %v1621, 1.442695
      %v1627 = vpow.pop %v1626
      %v1628 = vmul.f32 %v1622, 1.442695
      %v1629 = vpow.pop %v1628
      %v1630 = vmul.f32 %v1623, 1.442695
      %v1631 = vpow.pop %v1630
      %v1632 = vadd.f32 %v1625, 1.0
      %v1633 = vadd.f32 %v1627, 1.0
      %v1634 = vadd.f32 %v1629, 1.0
      %v1635 = vadd.f32 %v1631, 1.0
      %v1636 = vrcp.pop %v1632
      %v1637 = vmul.f32 1.0, %v1636
      %v1638 = vrcp.pop %v1633
      %v1639 = vmul.f32 1.0, %v1638
      %v1640 = vrcp.pop %v1634
      %v1641 = vmul.f32 1.0, %v1640
      %v1642 = vrcp.pop %v1635
      %v1643 = vmul.f32 1.0, %v1642
      %v1644 = vmul.f32 %v1616, %v1637
      %v1645 = vmul.f32 %v1617, %v1639
      %v1646 = vmul.f32 %v1618, %v1641
      %v1647 = vmul.f32 %v1619, %v1643
      %v1648 = vld [vmem:[%s10] sm:$0xff]
      %v1649 = vld [vmem:[%s10 + $0x8] sm:$0xff]
      %v1650 = vld [vmem:[%s11] sm:$0xff]
      %v1651 = vld [vmem:[%s11 + $0x8] sm:$0xff]
      %1653 = vset.pattern.permute.xlu0 0
      %1654 = vperm.xlu0 %1653, %v1650
      %v1655 = vpop.permute.xlu0 %1654
      %1658 = vset.pattern.permute.xlu0 0
      %1659 = vperm.xlu0 %1658, %v1651
      %v1660 = vpop.permute.xlu0 %1659
      %v1663 = vsel %vm432, %v1648, 0
      %v1666 = vsel %vm432, %v1649, 0
      %1668 = vmatprep.subr.mxu0 %v1645
      %1669 = vmatpush1.msra.mxu0 %v1644
      %1670 = vmatprep.subr.mxu0 %v1647
      %1671 = vmatpush1.msra.mxu0 %v1646
      %1672 = vmatprep.subr.mxu0 0.0
      %1673 = vmatpush1.msra.mxu0 0.0
      %1674 = vmatprep.subr.mxu0 0.0
      %1675 = vmatpush1.msra.mxu0 0.0
      %1676 = vmatprep.subr.mxu0 0.0
      %1677 = vmatpush1.msra.mxu0 0.0
      %1678 = vmatprep.subr.mxu0 0.0
      %1679 = vmatpush1.msra.mxu0 0.0
      %1680 = vmatprep.subr.mxu0 0.0
      %1681 = vmatpush1.msra.mxu0 0.0
      %1682 = vmatprep.subr.mxu0 0.0
      %1683 = vmatpush1.msra.mxu0 0.0
      %1684 = vmatprep.subr.mxu0 0.0
      %1685 = vmatpush1.msra.mxu0 0.0
      %1686 = vmatprep.subr.mxu0 0.0
      %1687 = vmatpush1.msra.mxu0 0.0
      %1688 = vmatprep.subr.mxu0 0.0
      %1689 = vmatpush1.msra.mxu0 0.0
      %1690 = vmatprep.subr.mxu0 0.0
      %1691 = vmatpush1.msra.mxu0 0.0
      %1692 = vmatprep.subr.mxu0 0.0
      %1693 = vmatpush1.msra.mxu0 0.0
      %1694 = vmatprep.subr.mxu0 0.0
      %1695 = vmatpush1.msra.mxu0 0.0
      %1696 = vmatprep.subr.mxu0 0.0
      %1697 = vmatpush1.msra.mxu0 0.0
      %1698 = vmatprep.subr.mxu0 0.0
      %1699 = vmatpush1.msra.mxu0 0.0
      %1700 = vmatprep.subr.mxu0 0.0
      %1701 = vmatpush1.msra.mxu0 0.0
      %1702 = vmatprep.subr.mxu0 0.0
      %1703 = vmatpush1.msra.mxu0 0.0
      %1704 = vmatprep.subr.mxu0 0.0
      %1705 = vmatpush1.msra.mxu0 0.0
      %1706 = vmatprep.subr.mxu0 0.0
      %1707 = vmatpush1.msra.mxu0 0.0
      %1708 = vmatprep.subr.mxu0 0.0
      %1709 = vmatpush1.msra.mxu0 0.0
      %1710 = vmatprep.subr.mxu0 0.0
      %1711 = vmatpush1.msra.mxu0 0.0
      %1712 = vmatprep.subr.mxu0 0.0
      %1713 = vmatpush1.msra.mxu0 0.0
      %1714 = vmatprep.subr.mxu0 0.0
      %1715 = vmatpush1.msra.mxu0 0.0
      %1716 = vmatprep.subr.mxu0 0.0
      %1717 = vmatpush1.msra.mxu0 0.0
      %1718 = vmatprep.subr.mxu0 0.0
      %1719 = vmatpush1.msra.mxu0 0.0
      %1720 = vmatprep.subr.mxu0 0.0
      %1721 = vmatpush1.msra.mxu0 0.0
      %1722 = vmatprep.subr.mxu0 0.0
      %1723 = vmatpush1.msra.mxu0 0.0
      %1724 = vmatprep.subr.mxu0 0.0
      %1725 = vmatpush1.msra.mxu0 0.0
      %1726 = vmatprep.subr.mxu0 0.0
      %1727 = vmatpush1.msra.mxu0 0.0
      %1728 = vmatprep.subr.mxu0 0.0
      %1729 = vmatpush1.msra.mxu0 0.0
      %1730 = vmatprep.subr.mxu0 0.0
      %1731 = vmatpush1.msra.mxu0 0.0
      %1732 = vmatprep.mubr.f32.mxu0 0.0
      %1733 = vmatmul.mubr.f32.gmra.mrb[0].mxu0 %v1663
      %v1734 = vpop.f32.mrb[0].mxu0
      %v1735 = vadd.f32 %v1655, %v1734
      %v1736 = vpop.f32.mrb[0].mxu0
      %v1737 = vadd.f32 %v1655, %v1736
      %1738 = vmatprep.mubr.f32.mxu0 0.0
      %1739 = vmatmul.mubr.f32.gmra.mrb[0].mxu0 %v1666
      %v1740 = vpop.f32.mrb[0].mxu0
      %v1741 = vadd.f32 %v1660, %v1740
      %v1742 = vpop.f32.mrb[0].mxu0
      %v1743 = vadd.f32 %v1660, %v1742
      %1744 = vdwg.mxu0
      %v1745 = vadd.f32 %v1735, %v414
      %v1746 = vadd.f32 %v1737, %v415
      %v1747 = vadd.f32 %v1741, %v416
      %v1748 = vadd.f32 %v1743, %v417
      %v1749 = vmax.f32 %v1745, 0.0
      %v1750 = vmax.f32 %v1746, 0.0
      %v1751 = vmax.f32 %v1747, 0.0
      %v1752 = vmax.f32 %v1748, 0.0
      %1753 = vst [vmem:[%s413] sm:$0xff] %v1749
      %1754 = vst [vmem:[%s413 + $0x8] sm:$0xff] %v1750
      %1755 = vst [vmem:[%s413 + $0x10] sm:$0xff] %v1751
      %1756 = vst [vmem:[%s413 + $0x18] sm:$0xff] %v1752
      %p1757 = scmp.lt.s32.totalorder %s23, 1
      %s1758 = scalar_select %p1757, %s23, 1
      %s1759 = smul.addr %s1758, 4
      %s1760 = smul.addr %s1759, 8
      %s1761 = scalar_lea.vmem %s12, %s1760
      // Predicated region
      $region69: #{bottleneck_forward.1} parent=67 // pred_check
        %p1762 = pneg %p298
      $region70: #{bottleneck_forward.1} parent=67 // pred_check_branch
        %1764 = sbr.rel (%p1762) target = $region72
      $region71: #{bottleneck_forward.1} parent=67 // pred_region
        _
      $region72: #{bottleneck_forward.1} parent=67 // pred_fallthru
        _
    $region68: #{bottleneck_forward.1} parent=5 // pred_fallthru
      _
    %p1765 = scmp.le.s32.totalorder 2, %s18
    // Predicated region
    $region73: #{bottleneck_forward.1} parent=5 // pred_check
      %p1766 = pneg %p1765
    $region74: #{bottleneck_forward.1} parent=5 // pred_check_branch
      %1768 = sbr.rel (%p1766) target = $region76
    $region75: #{bottleneck_forward.1} parent=5 // pred_region
      %s1769 = ssub.s32 %s18, 2
      // Predicated region
      $region77: #{bottleneck_forward.1} parent=75 // pred_check
        %p1770 = pneg %p304
      $region78: #{bottleneck_forward.1} parent=75 // pred_check_branch
        %1772 = sbr.rel (%p1770) target = $region80
      $region79: #{bottleneck_forward.1} parent=75 // pred_region
        %p1773 = scmp.lt.s32.totalorder %s24, 1
        %s1774 = scalar_select %p1773, %s24, 1
        %s1775 = smul.addr %s1774, 4
        %s1776 = smul.addr %s1775, 8
        %s1777 = scalar_lea.vmem %s12, %s1776
      $region80: #{bottleneck_forward.1} parent=75 // pred_fallthru
        _
    $region76: #{bottleneck_forward.1} parent=5 // pred_fallthru
      _
  $region6: #{bottleneck_forward.1} parent=0 // loop_footer
    %s22 = sadd.s32 1, %s18
  $region7: #{bottleneck_forward.1} parent=0 // loop_footer_branch
    %17 = sbr.rel target = $region3
  $region8: #{bottleneck_forward.1} parent=0 // loop_exit
    _

</llo_original>
